<compile_context>
chip_gen: v7x
topology: tpu7x:2x2x1
jax: 0.10.0
libtpu: 0.0.40
codegen_flags: <defaults>
</compile_context>

<pallas_src>
import jax
import jax.numpy as jnp
from jax import lax
from jax.experimental import pallas as pl
from jax.experimental.pallas import tpu as pltpu
from jax.scipy.special import logsumexp

# ------------------------- small synthetic BERT config -------------------------
B, S = 2, 8
BS = B * S
H = 32
NUM_HEADS = 4
HEAD_DIM = H // NUM_HEADS
INTER = 64
VOCAB = 100
MAX_POS = 16
TYPE_VOCAB = 2
NUM_LAYERS = 2
NUM_LABELS = 3
NUM_NER_LABELS = 5
LN_EPS = 1e-12
HEAD_PAD = 128                # lane-dense padded width of the fused cls+NER head
MXU_DTYPE = jnp.bfloat16      # MXU operand dtype (accumulation stays f32)


# ------------------------------ in-kernel helpers -------------------------------
def _mm(a, b):
    """a[M,K] @ b[K,N] on the MXU: bf16 operands, f32 accumulation."""
    return lax.dot_general(a.astype(MXU_DTYPE), b.astype(MXU_DTYPE),
                           (((1,), (0,)), ((), ())),
                           preferred_element_type=jnp.float32)


def _mm_t(a, b):
    """a[M,K] @ b[N,K]^T on the MXU: bf16 operands, f32 accumulation."""
    return lax.dot_general(a.astype(MXU_DTYPE), b.astype(MXU_DTYPE),
                           (((1,), (1,)), ((), ())),
                           preferred_element_type=jnp.float32)


def _layernorm(x, g, b):
    mean = jnp.mean(x, axis=-1, keepdims=True)
    var = jnp.mean(jnp.square(x - mean), axis=-1, keepdims=True)
    return (x - mean) * lax.rsqrt(var + LN_EPS) * g + b


def _gelu(x):
    # TODO(synk): HF BERT default is erf-GELU; tanh approximation used here (synthetic weights).
    return 0.5 * x * (1.0 + jnp.tanh(0.7978845608028654 * (x + 0.044715 * x * x * x)))


# ------------------------------- fused encoder kernel ---------------------------
def _encoder_kernel(x_ref, mask_ref, embg_ref, embb_ref,
                    wqkv_ref, bqkv_ref, wo_ref, bo_ref, ln1g_ref, ln1b_ref,
                    wi_ref, bi_ref, wo2_ref, bo2_ref, ln2g_ref, ln2b_ref,
                    headw_ref, headb_ref,
                    out_ref, act_ref):
    layer = pl.program_id(0)

    # layer 0: embedding LayerNorm seeds the resident activation (no zeros-residual slab).
    @pl.when(layer == 0)
    def _():
        act_ref[...] = _layernorm(x_ref[...], embg_ref[...], embb_ref[...])

    a = act_ref[...]                       # [B*S, H] f32, resident across the layer axis
    mask = mask_ref[...]                   # [B*S, B*S] block-diagonal additive attention mask

    # fused QKV projection: one [B*S,H] @ [H,3H] MXU pass
    qkv = _mm(a, wqkv_ref[0]) + bqkv_ref[0]             # [B*S, 3H]

    scale = 1.0 / (HEAD_DIM ** 0.5)
    ctx_heads = []
    for h in range(NUM_HEADS):                          # static unroll: in-kernel head split
        lo = h * HEAD_DIM
        q_h = qkv[:, lo:lo + HEAD_DIM]                  # [B*S, D]
        k_h = qkv[:, H + lo:H + lo + HEAD_DIM]
        v_h = qkv[:, 2 * H + lo:2 * H + lo + HEAD_DIM]
        s = _mm_t(q_h, k_h) * scale + mask              # [B*S, B*S]
        m = jnp.max(s, axis=-1, keepdims=True)
        p = jnp.exp(s - m)
        p = p * pl.reciprocal(jnp.sum(p, axis=-1, keepdims=True), approx=True)
        ctx_heads.append(_mm(p, v_h))                   # [B*S, D]
    ctx = jnp.concatenate(ctx_heads, axis=-1)           # [B*S, H]

    attn_out = _mm(ctx, wo_ref[0]) + bo_ref[0]
    x1 = _layernorm(attn_out + a, ln1g_ref[0], ln1b_ref[0])

    inter = _gelu(_mm(x1, wi_ref[0]) + bi_ref[0])
    ffn = _mm(inter, wo2_ref[0]) + bo2_ref[0]
    x2 = _layernorm(ffn + x1, ln2g_ref[0], ln2b_ref[0])

    act_ref[...] = x2

    # last layer: fused, lane-dense (128-wide) classifier + NER head
    @pl.when(layer == NUM_LAYERS - 1)
    def _():
        out_ref[...] = (_mm(x2, headw_ref[...]) + headb_ref[...]).astype(out_ref.dtype)


def encoder_forward(p, emb_flat, attn_mask_full):
    per_layer = lambda shape: pl.BlockSpec((1,) + shape, lambda l: (l, 0, 0))
    shared2d = lambda shape: pl.BlockSpec(shape, lambda l: (0, 0))
    return pl.pallas_call(
        _encoder_kernel,
        out_shape=jax.ShapeDtypeStruct((BS, HEAD_PAD), jnp.float32),
        grid_spec=pltpu.PrefetchScalarGridSpec(
            num_scalar_prefetch=0,
            grid=(NUM_LAYERS,),
            in_specs=[
                shared2d((BS, H)),                                  # summed embeddings (flat)
                shared2d((BS, BS)),                                 # block-diag attention mask
                shared2d((1, H)), shared2d((1, H)),                 # embedding LN gamma/beta
                per_layer((H, 3 * H)), per_layer((1, 3 * H)),       # fused QKV
                per_layer((H, H)), per_layer((1, H)),               # attention output proj
                per_layer((1, H)), per_layer((1, H)),               # LN1
                per_layer((H, INTER)), per_layer((1, INTER)),       # FFN up
                per_layer((INTER, H)), per_layer((1, H)),           # FFN down
                per_layer((1, H)), per_layer((1, H)),               # LN2
                shared2d((H, HEAD_PAD)), shared2d((1, HEAD_PAD)),   # fused cls+NER head
            ],
            out_specs=pl.BlockSpec((BS, HEAD_PAD), lambda l: (0, 0)),
            scratch_shapes=[pltpu.VMEM((BS, H), jnp.float32)],      # activation carrier
        ),
        compiler_params=pltpu.CompilerParams(
            dimension_semantics=("arbitrary",)),
    )(emb_flat, attn_mask_full, p["emb_ln_g"], p["emb_ln_b"],
      p["wqkv"], p["bqkv"], p["wo"], p["bo"], p["ln1_g"], p["ln1_b"],
      p["wi"], p["bi"], p["wo2"], p["bo2"], p["ln2_g"], p["ln2_b"],
      p["head_w"], p["head_b"])


# ------------------------------ parameter init ---------------------------------
def init_params(key):
    keys = iter(jax.random.split(key, 32))
    nrm = lambda shape: 0.02 * jax.random.normal(next(keys), shape, jnp.float32)
    uni = lambda shape: jax.random.uniform(next(keys), shape, jnp.float32, -0.1, 0.1)
    L = NUM_LAYERS
    cls_w = nrm((H, NUM_LABELS))
    ner_w = nrm((H, NUM_NER_LABELS))
    head_w = jnp.zeros((H, HEAD_PAD), jnp.float32)
    head_w = head_w.at[:, :NUM_NER_LABELS].set(ner_w)
    head_w = head_w.at[:, NUM_NER_LABELS:NUM_NER_LABELS + NUM_LABELS].set(cls_w)
    return {
        "word_emb": nrm((VOCAB, H)),
        "pos_emb": nrm((MAX_POS, H)),
        "type_emb": nrm((TYPE_VOCAB, H)),
        "emb_ln_g": jnp.ones((1, H), jnp.float32),
        "emb_ln_b": jnp.zeros((1, H), jnp.float32),
        # stacked per-layer encoder weights (selected by the layer grid index)
        "wqkv": nrm((L, H, 3 * H)),
        "bqkv": jnp.zeros((L, 1, 3 * H), jnp.float32),
        "wo": nrm((L, H, H)),
        "bo": jnp.zeros((L, 1, H), jnp.float32),
        "ln1_g": jnp.ones((L, 1, H), jnp.float32),
        "ln1_b": jnp.zeros((L, 1, H), jnp.float32),
        "wi": nrm((L, H, INTER)),
        "bi": jnp.zeros((L, 1, INTER), jnp.float32),
        "wo2": nrm((L, INTER, H)),
        "bo2": jnp.zeros((L, 1, H), jnp.float32),
        "ln2_g": jnp.ones((L, 1, H), jnp.float32),
        "ln2_b": jnp.zeros((L, 1, H), jnp.float32),
        # fused, zero-padded classifier + NER head (lane-dense output width 128)
        "head_w": head_w,
        "head_b": jnp.zeros((1, HEAD_PAD), jnp.float32),
        "crf_start": uni((NUM_NER_LABELS,)),
        "crf_end": uni((NUM_NER_LABELS,)),
        "crf_trans": uni((NUM_NER_LABELS, NUM_NER_LABELS)),
    }


# ------------------------------------ CRF ---------------------------------------
# (torchcrf semantics; tiny tag dim + sequential recurrence -> plain JAX lax.scan)
def crf_log_likelihood(emissions, tags, mask, start_t, end_t, trans):
    em = jnp.swapaxes(emissions, 0, 1)                   # [S,B,T]
    tg = jnp.swapaxes(tags, 0, 1)                        # [S,B]
    mk = jnp.swapaxes(mask, 0, 1).astype(jnp.float32)    # [S,B]
    Sn, Bn, Tn = em.shape
    barange = jnp.arange(Bn)

    # numerator: score of the given tag sequence
    num0 = start_t[tg[0]] + em[0][barange, tg[0]]
    def num_step(score, inp):
        e_i, t_prev, t_cur, m_i = inp
        score = score + (trans[t_prev, t_cur] + e_i[barange, t_cur]) * m_i
        return score, None
    numerator, _ = lax.scan(num_step, num0, (em[1:], tg[:-1], tg[1:], mk[1:]))
    seq_ends = jnp.sum(mk, axis=0).astype(jnp.int32) - 1
    last_tags = tg[seq_ends, barange]
    numerator = numerator + end_t[last_tags]

    # denominator: log partition (forward algorithm)
    den0 = start_t[None, :] + em[0]
    def den_step(score, inp):
        e_i, m_i = inp
        nxt = logsumexp(score[:, :, None] + trans[None] + e_i[:, None, :], axis=1)
        return jnp.where(m_i[:, None] > 0, nxt, score), None
    den, _ = lax.scan(den_step, den0, (em[1:], mk[1:]))
    denominator = logsumexp(den + end_t[None, :], axis=1)
    return numerator - denominator                        # llh per batch (reduction='none')


def crf_viterbi_decode(emissions, mask, start_t, end_t, trans):
    em = jnp.swapaxes(emissions, 0, 1)                    # [S,B,T]
    mk = jnp.swapaxes(mask, 0, 1).astype(jnp.float32)     # [S,B]
    Sn, Bn, Tn = em.shape
    seq_ends = jnp.sum(mk, axis=0).astype(jnp.int32) - 1

    score0 = start_t[None, :] + em[0]
    def fwd(score, inp):
        e_i, m_i = inp
        bc = score[:, :, None] + trans[None]              # [B, T_prev, T_cur]
        nxt = jnp.max(bc, axis=1) + e_i
        idx = jnp.argmax(bc, axis=1).astype(jnp.int32)
        nxt = jnp.where(m_i[:, None] > 0, nxt, score)
        return nxt, idx
    final_score, history = lax.scan(fwd, score0, (em[1:], mk[1:]))   # history: [S-1,B,T]
    final_score = final_score + end_t[None, :]
    best_last = jnp.argmax(final_score, axis=1).astype(jnp.int32)    # [B]

    ts = jnp.arange(Sn - 1)
    def back(cur, inp):
        t, hist_t = inp                                   # hist_t: [B,T]
        prev = jnp.take_along_axis(hist_t, cur[:, None], axis=1)[:, 0]
        new_cur = jnp.where(t < seq_ends, prev, cur)
        out = jnp.where(t < seq_ends, prev,
                        jnp.where(t == seq_ends, cur, jnp.zeros_like(cur)))
        return new_cur, out
    _, tags_head = lax.scan(back, best_last, (ts, history), reverse=True)  # [S-1, B]
    tag_last = jnp.where(seq_ends == Sn - 1, best_last, 0)
    # TODO(synk): torchcrf .decode returns variable-length Python lists; padded [B,S] array here.
    return jnp.concatenate([tags_head.T, tag_last[:, None]], axis=1)


# ------------------------------- full forward -----------------------------------
def model_forward(p, input_ids, token_type_ids, attention_mask, labels, ner_labels, ner_mask):
    pos_ids = jnp.arange(S)[None, :]
    emb = (p["word_emb"][input_ids] + p["pos_emb"][pos_ids]
           + p["type_emb"][token_type_ids])                                       # [B,S,H]
    emb_flat = emb.reshape(BS, H)

    # block-diagonal additive attention mask over the folded (B*S) rows:
    #   in-batch key padding -> -10000 (standard BERT additive mask), cross-batch -> -1e9
    key_bias = (1.0 - attention_mask.astype(jnp.float32)) * -10000.0              # [B,S]
    same_batch = jnp.eye(B, dtype=bool)[:, None, :, None]                         # [B,1,B,1]
    mask4 = jnp.where(same_batch,
                      jnp.broadcast_to(key_bias[None, None, :, :], (B, S, B, S)),
                      jnp.float32(-1e9))
    attn_mask_full = mask4.reshape(BS, BS)                                        # [B*S,B*S]

    head_out = encoder_forward(p, emb_flat, attn_mask_full).reshape(B, S, HEAD_PAD)
    ner_logits = head_out[:, :, :NUM_NER_LABELS]                                  # [B,S,T]
    # reference module feeds sequence_output[:,0,:] straight into the classifier (no pooler)
    logits = head_out[:, 0, NUM_NER_LABELS:NUM_NER_LABELS + NUM_LABELS]           # [B,num_labels]

    llh = crf_log_likelihood(ner_logits, ner_labels, ner_mask,
                             p["crf_start"], p["crf_end"], p["crf_trans"])
    ner_loss = jnp.mean(-llh)
    ner_predict = crf_viterbi_decode(ner_logits, ner_mask,
                                     p["crf_start"], p["crf_end"], p["crf_trans"])

    # CrossEntropyLoss (mean over batch) -- tiny, plain JAX
    logp = jax.nn.log_softmax(logits, axis=-1)
    loss = -jnp.mean(jnp.take_along_axis(logp, labels[:, None], axis=1)[:, 0])
    return loss, ner_loss, logits, ner_predict


if __name__ == "__main__":
    key = jax.random.PRNGKey(0)
    pkey, k1, k2, k3 = jax.random.split(key, 4)
    params = init_params(pkey)

    input_ids = jax.random.randint(k1, (B, S), 0, VOCAB)
    token_type_ids = jnp.zeros((B, S), jnp.int32)
    attention_mask = jnp.array([[1] * S, [1] * (S - 2) + [0, 0]], jnp.int32)
    labels = jax.random.randint(k2, (B,), 0, NUM_LABELS)
    ner_labels = jax.random.randint(k3, (B, S), 0, NUM_NER_LABELS)
    ner_mask = attention_mask  # first timestep is on for every example (CRF requirement)

    fwd = jax.jit(model_forward)
    loss, ner_loss, logits, ner_predict = fwd(params, input_ids, token_type_ids,
                                              attention_mask, labels, ner_labels, ner_mask)
    jax.block_until_ready((loss, ner_loss, logits, ner_predict))
    print("KERNEL_OK")
</pallas_src>

<mosaic_0001>
module attributes {stable_mosaic.version = 11 : i64} {
  func.func @_encoder_kernel(%arg0: i32, %arg1: memref<16x32xf32, #tpu.memory_space<vmem>>, %arg2: memref<16x16xf32, #tpu.memory_space<vmem>>, %arg3: memref<1x32xf32, #tpu.memory_space<vmem>>, %arg4: memref<1x32xf32, #tpu.memory_space<vmem>>, %arg5: memref<1x32x96xf32, #tpu.memory_space<vmem>>, %arg6: memref<1x1x96xf32, #tpu.memory_space<vmem>>, %arg7: memref<1x32x32xf32, #tpu.memory_space<vmem>>, %arg8: memref<1x1x32xf32, #tpu.memory_space<vmem>>, %arg9: memref<1x1x32xf32, #tpu.memory_space<vmem>>, %arg10: memref<1x1x32xf32, #tpu.memory_space<vmem>>, %arg11: memref<1x32x64xf32, #tpu.memory_space<vmem>>, %arg12: memref<1x1x64xf32, #tpu.memory_space<vmem>>, %arg13: memref<1x64x32xf32, #tpu.memory_space<vmem>>, %arg14: memref<1x1x32xf32, #tpu.memory_space<vmem>>, %arg15: memref<1x1x32xf32, #tpu.memory_space<vmem>>, %arg16: memref<1x1x32xf32, #tpu.memory_space<vmem>>, %arg17: memref<32x128xf32, #tpu.memory_space<vmem>>, %arg18: memref<1x128xf32, #tpu.memory_space<vmem>>, %arg19: memref<16x128xf32, #tpu.memory_space<vmem>>, %arg20: memref<16x32xf32, #tpu.memory_space<vmem>>) attributes {dimension_semantics = [#tpu.dimension_semantics<arbitrary>], iteration_bounds = array<i64: 2>, scalar_prefetch = 0 : i64, scratch_operands = 1 : i64, tpu.core_type = #tpu.core_type<tc>, window_params = [{pipeline_mode = #tpu.pipeline_mode<synchronous>, transform_indices = @transform_0, window_bounds = array<i64: 16, 32>}, {pipeline_mode = #tpu.pipeline_mode<synchronous>, transform_indices = @transform_1, window_bounds = array<i64: 16, 16>}, {pipeline_mode = #tpu.pipeline_mode<synchronous>, transform_indices = @transform_2, window_bounds = array<i64: 1, 32>}, {pipeline_mode = #tpu.pipeline_mode<synchronous>, transform_indices = @transform_3, window_bounds = array<i64: 1, 32>}, {transform_indices = @transform_4, window_bounds = array<i64: 1, 32, 96>}, {transform_indices = @transform_5, window_bounds = array<i64: 1, 1, 96>}, {transform_indices = @transform_6, window_bounds = array<i64: 1, 32, 32>}, {transform_indices = @transform_7, window_bounds = array<i64: 1, 1, 32>}, {transform_indices = @transform_8, window_bounds = array<i64: 1, 1, 32>}, {transform_indices = @transform_9, window_bounds = array<i64: 1, 1, 32>}, {transform_indices = @transform_10, window_bounds = array<i64: 1, 32, 64>}, {transform_indices = @transform_11, window_bounds = array<i64: 1, 1, 64>}, {transform_indices = @transform_12, window_bounds = array<i64: 1, 64, 32>}, {transform_indices = @transform_13, window_bounds = array<i64: 1, 1, 32>}, {transform_indices = @transform_14, window_bounds = array<i64: 1, 1, 32>}, {transform_indices = @transform_15, window_bounds = array<i64: 1, 1, 32>}, {pipeline_mode = #tpu.pipeline_mode<synchronous>, transform_indices = @transform_16, window_bounds = array<i64: 32, 128>}, {pipeline_mode = #tpu.pipeline_mode<synchronous>, transform_indices = @transform_17, window_bounds = array<i64: 1, 128>}, {pipeline_mode = #tpu.pipeline_mode<synchronous>, transform_indices = @transform_18, window_bounds = array<i64: 16, 128>}]} {
    %c0_i32 = arith.constant 0 : i32
    %0 = arith.cmpi eq, %arg0, %c0_i32 : i32
    %1 = arith.extui %0 : i1 to i32
    %c0_i32_0 = arith.constant 0 : i32
    %2 = arith.cmpi ne, %1, %c0_i32_0 : i32
    scf.if %2 {
      %c0_80 = arith.constant 0 : index
      %c0_81 = arith.constant 0 : index
      %201 = vector.load %arg1[%c0_80, %c0_81] : memref<16x32xf32, #tpu.memory_space<vmem>>, vector<16x32xf32>
      %c0_82 = arith.constant 0 : index
      %c0_83 = arith.constant 0 : index
      %202 = vector.load %arg3[%c0_82, %c0_83] : memref<1x32xf32, #tpu.memory_space<vmem>>, vector<1x32xf32>
      %c0_84 = arith.constant 0 : index
      %c0_85 = arith.constant 0 : index
      %203 = vector.load %arg4[%c0_84, %c0_85] : memref<1x32xf32, #tpu.memory_space<vmem>>, vector<1x32xf32>
      %cst_86 = arith.constant dense<0.000000e+00> : vector<16xf32>
      %204 = vector.multi_reduction <add>, %201, %cst_86 [1] : vector<16x32xf32> to vector<16xf32>
      %205 = vector.shape_cast %204 : vector<16xf32> to vector<16x1xf32>
      %cst_87 = arith.constant 3.200000e+01 : f32
      %206 = vector.broadcast %cst_87 : f32 to vector<16x1xf32>
      %207 = arith.divf %205, %206 : vector<16x1xf32>
      %208 = vector.broadcast %207 : vector<16x1xf32> to vector<16x32xf32>
      %209 = arith.subf %201, %208 : vector<16x32xf32>
      %210 = arith.mulf %209, %209 : vector<16x32xf32>
      %cst_88 = arith.constant dense<0.000000e+00> : vector<16xf32>
      %211 = vector.multi_reduction <add>, %210, %cst_88 [1] : vector<16x32xf32> to vector<16xf32>
      %212 = vector.shape_cast %211 : vector<16xf32> to vector<16x1xf32>
      %cst_89 = arith.constant 3.200000e+01 : f32
      %213 = vector.broadcast %cst_89 : f32 to vector<16x1xf32>
      %214 = arith.divf %212, %213 : vector<16x1xf32>
      %215 = vector.broadcast %207 : vector<16x1xf32> to vector<16x32xf32>
      %216 = arith.subf %201, %215 : vector<16x32xf32>
      %cst_90 = arith.constant 9.99999996E-13 : f32
      %217 = vector.broadcast %cst_90 : f32 to vector<16x1xf32>
      %218 = arith.addf %214, %217 : vector<16x1xf32>
      %219 = math.rsqrt %218 : vector<16x1xf32>
      %220 = vector.broadcast %219 : vector<16x1xf32> to vector<16x32xf32>
      %221 = arith.mulf %216, %220 : vector<16x32xf32>
      %222 = vector.broadcast %202 : vector<1x32xf32> to vector<16x32xf32>
      %223 = arith.mulf %221, %222 : vector<16x32xf32>
      %224 = vector.broadcast %203 : vector<1x32xf32> to vector<16x32xf32>
      %225 = arith.addf %223, %224 : vector<16x32xf32>
      %c0_91 = arith.constant 0 : index
      %c0_92 = arith.constant 0 : index
      %226 = vector.load %arg20[%c0_91, %c0_92] : memref<16x32xf32, #tpu.memory_space<vmem>>, vector<16x32xf32>
      tpu.vector_store %arg20[%c0_91, %c0_92], %225 {strides = array<i32>} : memref<16x32xf32, #tpu.memory_space<vmem>>, vector<16x32xf32>,
    } else {
    }
    %c0 = arith.constant 0 : index
    %c0_1 = arith.constant 0 : index
    %3 = vector.load %arg20[%c0, %c0_1] : memref<16x32xf32, #tpu.memory_space<vmem>>, vector<16x32xf32>
    %c0_2 = arith.constant 0 : index
    %c0_3 = arith.constant 0 : index
    %4 = vector.load %arg2[%c0_2, %c0_3] : memref<16x16xf32, #tpu.memory_space<vmem>>, vector<16x16xf32>
    %c0_4 = arith.constant 0 : index
    %c0_5 = arith.constant 0 : index
    %c0_6 = arith.constant 0 : index
    %5 = vector.load %arg5[%c0_4, %c0_5, %c0_6] : memref<1x32x96xf32, #tpu.memory_space<vmem>>, vector<1x32x96xf32>
    %6 = vector.shape_cast %5 : vector<1x32x96xf32> to vector<32x96xf32>
    %7 = arith.truncf %3 : vector<16x32xf32> to vector<16x32xbf16>
    %8 = arith.truncf %6 : vector<32x96xf32> to vector<32x96xbf16>
    %cst = arith.constant dense<0.000000e+00> : vector<16x96xf32>
    %9 = tpu.matmul %7, %8, %cst {dimension_numbers = #tpu.dot_dimension_numbers<[1], [0], [0], [1], [0, 0, 1, 1], [], []>} : vector<16x32xbf16>, vector<32x96xbf16>, vector<16x96xf32> -> vector<16x96xf32>
    %c0_7 = arith.constant 0 : index
    %c0_8 = arith.constant 0 : index
    %c0_9 = arith.constant 0 : index
    %10 = vector.load %arg6[%c0_7, %c0_8, %c0_9] : memref<1x1x96xf32, #tpu.memory_space<vmem>>, vector<1x1x96xf32>
    %11 = vector.shape_cast %10 : vector<1x1x96xf32> to vector<1x96xf32>
    %12 = vector.broadcast %11 : vector<1x96xf32> to vector<16x96xf32>
    %13 = arith.addf %9, %12 : vector<16x96xf32>
    %14 = vector.extract_strided_slice %13 {offsets = [0, 0], sizes = [16, 8], strides = [1, 1]} : vector<16x96xf32> to vector<16x8xf32>
    %15 = vector.extract_strided_slice %13 {offsets = [0, 32], sizes = [16, 8], strides = [1, 1]} : vector<16x96xf32> to vector<16x8xf32>
    %16 = vector.extract_strided_slice %13 {offsets = [0, 64], sizes = [16, 8], strides = [1, 1]} : vector<16x96xf32> to vector<16x8xf32>
    %17 = arith.truncf %14 : vector<16x8xf32> to vector<16x8xbf16>
    %18 = arith.truncf %15 : vector<16x8xf32> to vector<16x8xbf16>
    %cst_10 = arith.constant dense<0.000000e+00> : vector<16x16xf32>
    %19 = tpu.matmul %17, %18, %cst_10 {dimension_numbers = #tpu.dot_dimension_numbers<[1], [1], [0], [0], [0, 0, 1, 0], [], []>} : vector<16x8xbf16>, vector<16x8xbf16>, vector<16x16xf32> -> vector<16x16xf32>
    %cst_11 = arith.constant 0.353553385 : f32
    %20 = vector.broadcast %cst_11 : f32 to vector<16x16xf32>
    %21 = arith.mulf %19, %20 : vector<16x16xf32>
    %22 = arith.addf %21, %4 : vector<16x16xf32>
    %cst_12 = arith.constant dense<0xFF800000> : vector<16xf32>
    %23 = vector.multi_reduction <maximumf>, %22, %cst_12 [1] : vector<16x16xf32> to vector<16xf32>
    %24 = vector.shape_cast %23 : vector<16xf32> to vector<16x1xf32>
    %25 = vector.broadcast %24 : vector<16x1xf32> to vector<16x16xf32>
    %26 = arith.subf %22, %25 : vector<16x16xf32>
    %27 = math.exp %26 : vector<16x16xf32>
    %cst_13 = arith.constant dense<0.000000e+00> : vector<16xf32>
    %28 = vector.multi_reduction <add>, %27, %cst_13 [1] : vector<16x16xf32> to vector<16xf32>
    %29 = vector.shape_cast %28 : vector<16xf32> to vector<16x1xf32>
    %30 = tpu.reciprocal %29 {approx = true} : vector<16x1xf32> -> vector<16x1xf32>
    %31 = vector.broadcast %30 : vector<16x1xf32> to vector<16x16xf32>
    %32 = arith.mulf %27, %31 : vector<16x16xf32>
    %33 = arith.truncf %32 : vector<16x16xf32> to vector<16x16xbf16>
    %34 = arith.truncf %16 : vector<16x8xf32> to vector<16x8xbf16>
    %cst_14 = arith.constant dense<0.000000e+00> : vector<16x8xf32>
    %35 = tpu.matmul %33, %34, %cst_14 {dimension_numbers = #tpu.dot_dimension_numbers<[1], [0], [0], [1], [0, 0, 1, 1], [], []>} : vector<16x16xbf16>, vector<16x8xbf16>, vector<16x8xf32> -> vector<16x8xf32>
    %36 = vector.extract_strided_slice %13 {offsets = [0, 8], sizes = [16, 8], strides = [1, 1]} : vector<16x96xf32> to vector<16x8xf32>
    %37 = vector.extract_strided_slice %13 {offsets = [0, 40], sizes = [16, 8], strides = [1, 1]} : vector<16x96xf32> to vector<16x8xf32>
    %38 = vector.extract_strided_slice %13 {offsets = [0, 72], sizes = [16, 8], strides = [1, 1]} : vector<16x96xf32> to vector<16x8xf32>
    %39 = arith.truncf %36 : vector<16x8xf32> to vector<16x8xbf16>
    %40 = arith.truncf %37 : vector<16x8xf32> to vector<16x8xbf16>
    %cst_15 = arith.constant dense<0.000000e+00> : vector<16x16xf32>
    %41 = tpu.matmul %39, %40, %cst_15 {dimension_numbers = #tpu.dot_dimension_numbers<[1], [1], [0], [0], [0, 0, 1, 0], [], []>} : vector<16x8xbf16>, vector<16x8xbf16>, vector<16x16xf32> -> vector<16x16xf32>
    %cst_16 = arith.constant 0.353553385 : f32
    %42 = vector.broadcast %cst_16 : f32 to vector<16x16xf32>
    %43 = arith.mulf %41, %42 : vector<16x16xf32>
    %44 = arith.addf %43, %4 : vector<16x16xf32>
    %cst_17 = arith.constant dense<0xFF800000> : vector<16xf32>
    %45 = vector.multi_reduction <maximumf>, %44, %cst_17 [1] : vector<16x16xf32> to vector<16xf32>
    %46 = vector.shape_cast %45 : vector<16xf32> to vector<16x1xf32>
    %47 = vector.broadcast %46 : vector<16x1xf32> to vector<16x16xf32>
    %48 = arith.subf %44, %47 : vector<16x16xf32>
    %49 = math.exp %48 : vector<16x16xf32>
    %cst_18 = arith.constant dense<0.000000e+00> : vector<16xf32>
    %50 = vector.multi_reduction <add>, %49, %cst_18 [1] : vector<16x16xf32> to vector<16xf32>
    %51 = vector.shape_cast %50 : vector<16xf32> to vector<16x1xf32>
    %52 = tpu.reciprocal %51 {approx = true} : vector<16x1xf32> -> vector<16x1xf32>
    %53 = vector.broadcast %52 : vector<16x1xf32> to vector<16x16xf32>
    %54 = arith.mulf %49, %53 : vector<16x16xf32>
    %55 = arith.truncf %54 : vector<16x16xf32> to vector<16x16xbf16>
    %56 = arith.truncf %38 : vector<16x8xf32> to vector<16x8xbf16>
    %cst_19 = arith.constant dense<0.000000e+00> : vector<16x8xf32>
    %57 = tpu.matmul %55, %56, %cst_19 {dimension_numbers = #tpu.dot_dimension_numbers<[1], [0], [0], [1], [0, 0, 1, 1], [], []>} : vector<16x16xbf16>, vector<16x8xbf16>, vector<16x8xf32> -> vector<16x8xf32>
    %58 = vector.extract_strided_slice %13 {offsets = [0, 16], sizes = [16, 8], strides = [1, 1]} : vector<16x96xf32> to vector<16x8xf32>
    %59 = vector.extract_strided_slice %13 {offsets = [0, 48], sizes = [16, 8], strides = [1, 1]} : vector<16x96xf32> to vector<16x8xf32>
    %60 = vector.extract_strided_slice %13 {offsets = [0, 80], sizes = [16, 8], strides = [1, 1]} : vector<16x96xf32> to vector<16x8xf32>
    %61 = arith.truncf %58 : vector<16x8xf32> to vector<16x8xbf16>
    %62 = arith.truncf %59 : vector<16x8xf32> to vector<16x8xbf16>
    %cst_20 = arith.constant dense<0.000000e+00> : vector<16x16xf32>
    %63 = tpu.matmul %61, %62, %cst_20 {dimension_numbers = #tpu.dot_dimension_numbers<[1], [1], [0], [0], [0, 0, 1, 0], [], []>} : vector<16x8xbf16>, vector<16x8xbf16>, vector<16x16xf32> -> vector<16x16xf32>
    %cst_21 = arith.constant 0.353553385 : f32
    %64 = vector.broadcast %cst_21 : f32 to vector<16x16xf32>
    %65 = arith.mulf %63, %64 : vector<16x16xf32>
    %66 = arith.addf %65, %4 : vector<16x16xf32>
    %cst_22 = arith.constant dense<0xFF800000> : vector<16xf32>
    %67 = vector.multi_reduction <maximumf>, %66, %cst_22 [1] : vector<16x16xf32> to vector<16xf32>
    %68 = vector.shape_cast %67 : vector<16xf32> to vector<16x1xf32>
    %69 = vector.broadcast %68 : vector<16x1xf32> to vector<16x16xf32>
    %70 = arith.subf %66, %69 : vector<16x16xf32>
    %71 = math.exp %70 : vector<16x16xf32>
    %cst_23 = arith.constant dense<0.000000e+00> : vector<16xf32>
    %72 = vector.multi_reduction <add>, %71, %cst_23 [1] : vector<16x16xf32> to vector<16xf32>
    %73 = vector.shape_cast %72 : vector<16xf32> to vector<16x1xf32>
    %74 = tpu.reciprocal %73 {approx = true} : vector<16x1xf32> -> vector<16x1xf32>
    %75 = vector.broadcast %74 : vector<16x1xf32> to vector<16x16xf32>
    %76 = arith.mulf %71, %75 : vector<16x16xf32>
    %77 = arith.truncf %76 : vector<16x16xf32> to vector<16x16xbf16>
    %78 = arith.truncf %60 : vector<16x8xf32> to vector<16x8xbf16>
    %cst_24 = arith.constant dense<0.000000e+00> : vector<16x8xf32>
    %79 = tpu.matmul %77, %78, %cst_24 {dimension_numbers = #tpu.dot_dimension_numbers<[1], [0], [0], [1], [0, 0, 1, 1], [], []>} : vector<16x16xbf16>, vector<16x8xbf16>, vector<16x8xf32> -> vector<16x8xf32>
    %80 = vector.extract_strided_slice %13 {offsets = [0, 24], sizes = [16, 8], strides = [1, 1]} : vector<16x96xf32> to vector<16x8xf32>
    %81 = vector.extract_strided_slice %13 {offsets = [0, 56], sizes = [16, 8], strides = [1, 1]} : vector<16x96xf32> to vector<16x8xf32>
    %82 = vector.extract_strided_slice %13 {offsets = [0, 88], sizes = [16, 8], strides = [1, 1]} : vector<16x96xf32> to vector<16x8xf32>
    %83 = arith.truncf %80 : vector<16x8xf32> to vector<16x8xbf16>
    %84 = arith.truncf %81 : vector<16x8xf32> to vector<16x8xbf16>
    %cst_25 = arith.constant dense<0.000000e+00> : vector<16x16xf32>
    %85 = tpu.matmul %83, %84, %cst_25 {dimension_numbers = #tpu.dot_dimension_numbers<[1], [1], [0], [0], [0, 0, 1, 0], [], []>} : vector<16x8xbf16>, vector<16x8xbf16>, vector<16x16xf32> -> vector<16x16xf32>
    %cst_26 = arith.constant 0.353553385 : f32
    %86 = vector.broadcast %cst_26 : f32 to vector<16x16xf32>
    %87 = arith.mulf %85, %86 : vector<16x16xf32>
    %88 = arith.addf %87, %4 : vector<16x16xf32>
    %cst_27 = arith.constant dense<0xFF800000> : vector<16xf32>
    %89 = vector.multi_reduction <maximumf>, %88, %cst_27 [1] : vector<16x16xf32> to vector<16xf32>
    %90 = vector.shape_cast %89 : vector<16xf32> to vector<16x1xf32>
    %91 = vector.broadcast %90 : vector<16x1xf32> to vector<16x16xf32>
    %92 = arith.subf %88, %91 : vector<16x16xf32>
    %93 = math.exp %92 : vector<16x16xf32>
    %cst_28 = arith.constant dense<0.000000e+00> : vector<16xf32>
    %94 = vector.multi_reduction <add>, %93, %cst_28 [1] : vector<16x16xf32> to vector<16xf32>
    %95 = vector.shape_cast %94 : vector<16xf32> to vector<16x1xf32>
    %96 = tpu.reciprocal %95 {approx = true} : vector<16x1xf32> -> vector<16x1xf32>
    %97 = vector.broadcast %96 : vector<16x1xf32> to vector<16x16xf32>
    %98 = arith.mulf %93, %97 : vector<16x16xf32>
    %99 = arith.truncf %98 : vector<16x16xf32> to vector<16x16xbf16>
    %100 = arith.truncf %82 : vector<16x8xf32> to vector<16x8xbf16>
    %cst_29 = arith.constant dense<0.000000e+00> : vector<16x8xf32>
    %101 = tpu.matmul %99, %100, %cst_29 {dimension_numbers = #tpu.dot_dimension_numbers<[1], [0], [0], [1], [0, 0, 1, 1], [], []>} : vector<16x16xbf16>, vector<16x8xbf16>, vector<16x8xf32> -> vector<16x8xf32>
    %102 = tpu.concatenate %35, %57, %79, %101 in 1 : vector<16x8xf32>, vector<16x8xf32>, vector<16x8xf32>, vector<16x8xf32> -> vector<16x32xf32>
    %c0_30 = arith.constant 0 : index
    %c0_31 = arith.constant 0 : index
    %c0_32 = arith.constant 0 : index
    %103 = vector.load %arg7[%c0_30, %c0_31, %c0_32] : memref<1x32x32xf32, #tpu.memory_space<vmem>>, vector<1x32x32xf32>
    %104 = vector.shape_cast %103 : vector<1x32x32xf32> to vector<32x32xf32>
    %105 = arith.truncf %102 : vector<16x32xf32> to vector<16x32xbf16>
    %106 = arith.truncf %104 : vector<32x32xf32> to vector<32x32xbf16>
    %cst_33 = arith.constant dense<0.000000e+00> : vector<16x32xf32>
    %107 = tpu.matmul %105, %106, %cst_33 {dimension_numbers = #tpu.dot_dimension_numbers<[1], [0], [0], [1], [0, 0, 1, 1], [], []>} : vector<16x32xbf16>, vector<32x32xbf16>, vector<16x32xf32> -> vector<16x32xf32>
    %c0_34 = arith.constant 0 : index
    %c0_35 = arith.constant 0 : index
    %c0_36 = arith.constant 0 : index
    %108 = vector.load %arg8[%c0_34, %c0_35, %c0_36] : memref<1x1x32xf32, #tpu.memory_space<vmem>>, vector<1x1x32xf32>
    %109 = vector.shape_cast %108 : vector<1x1x32xf32> to vector<1x32xf32>
    %110 = vector.broadcast %109 : vector<1x32xf32> to vector<16x32xf32>
    %111 = arith.addf %107, %110 : vector<16x32xf32>
    %112 = arith.addf %111, %3 : vector<16x32xf32>
    %c0_37 = arith.constant 0 : index
    %c0_38 = arith.constant 0 : index
    %c0_39 = arith.constant 0 : index
    %113 = vector.load %arg9[%c0_37, %c0_38, %c0_39] : memref<1x1x32xf32, #tpu.memory_space<vmem>>, vector<1x1x32xf32>
    %114 = vector.shape_cast %113 : vector<1x1x32xf32> to vector<1x32xf32>
    %c0_40 = arith.constant 0 : index
    %c0_41 = arith.constant 0 : index
    %c0_42 = arith.constant 0 : index
    %115 = vector.load %arg10[%c0_40, %c0_41, %c0_42] : memref<1x1x32xf32, #tpu.memory_space<vmem>>, vector<1x1x32xf32>
    %116 = vector.shape_cast %115 : vector<1x1x32xf32> to vector<1x32xf32>
    %cst_43 = arith.constant dense<0.000000e+00> : vector<16xf32>
    %117 = vector.multi_reduction <add>, %112, %cst_43 [1] : vector<16x32xf32> to vector<16xf32>
    %118 = vector.shape_cast %117 : vector<16xf32> to vector<16x1xf32>
    %cst_44 = arith.constant 3.200000e+01 : f32
    %119 = vector.broadcast %cst_44 : f32 to vector<16x1xf32>
    %120 = arith.divf %118, %119 : vector<16x1xf32>
    %121 = vector.broadcast %120 : vector<16x1xf32> to vector<16x32xf32>
    %122 = arith.subf %112, %121 : vector<16x32xf32>
    %123 = arith.mulf %122, %122 : vector<16x32xf32>
    %cst_45 = arith.constant dense<0.000000e+00> : vector<16xf32>
    %124 = vector.multi_reduction <add>, %123, %cst_45 [1] : vector<16x32xf32> to vector<16xf32>
    %125 = vector.shape_cast %124 : vector<16xf32> to vector<16x1xf32>
    %cst_46 = arith.constant 3.200000e+01 : f32
    %126 = vector.broadcast %cst_46 : f32 to vector<16x1xf32>
    %127 = arith.divf %125, %126 : vector<16x1xf32>
    %128 = vector.broadcast %120 : vector<16x1xf32> to vector<16x32xf32>
    %129 = arith.subf %112, %128 : vector<16x32xf32>
    %cst_47 = arith.constant 9.99999996E-13 : f32
    %130 = vector.broadcast %cst_47 : f32 to vector<16x1xf32>
    %131 = arith.addf %127, %130 : vector<16x1xf32>
    %132 = math.rsqrt %131 : vector<16x1xf32>
    %133 = vector.broadcast %132 : vector<16x1xf32> to vector<16x32xf32>
    %134 = arith.mulf %129, %133 : vector<16x32xf32>
    %135 = vector.broadcast %114 : vector<1x32xf32> to vector<16x32xf32>
    %136 = arith.mulf %134, %135 : vector<16x32xf32>
    %137 = vector.broadcast %116 : vector<1x32xf32> to vector<16x32xf32>
    %138 = arith.addf %136, %137 : vector<16x32xf32>
    %c0_48 = arith.constant 0 : index
    %c0_49 = arith.constant 0 : index
    %c0_50 = arith.constant 0 : index
    %139 = vector.load %arg11[%c0_48, %c0_49, %c0_50] : memref<1x32x64xf32, #tpu.memory_space<vmem>>, vector<1x32x64xf32>
    %140 = vector.shape_cast %139 : vector<1x32x64xf32> to vector<32x64xf32>
    %141 = arith.truncf %138 : vector<16x32xf32> to vector<16x32xbf16>
    %142 = arith.truncf %140 : vector<32x64xf32> to vector<32x64xbf16>
    %cst_51 = arith.constant dense<0.000000e+00> : vector<16x64xf32>
    %143 = tpu.matmul %141, %142, %cst_51 {dimension_numbers = #tpu.dot_dimension_numbers<[1], [0], [0], [1], [0, 0, 1, 1], [], []>} : vector<16x32xbf16>, vector<32x64xbf16>, vector<16x64xf32> -> vector<16x64xf32>
    %c0_52 = arith.constant 0 : index
    %c0_53 = arith.constant 0 : index
    %c0_54 = arith.constant 0 : index
    %144 = vector.load %arg12[%c0_52, %c0_53, %c0_54] : memref<1x1x64xf32, #tpu.memory_space<vmem>>, vector<1x1x64xf32>
    %145 = vector.shape_cast %144 : vector<1x1x64xf32> to vector<1x64xf32>
    %146 = vector.broadcast %145 : vector<1x64xf32> to vector<16x64xf32>
    %147 = arith.addf %143, %146 : vector<16x64xf32>
    %cst_55 = arith.constant 5.000000e-01 : f32
    %148 = vector.broadcast %cst_55 : f32 to vector<16x64xf32>
    %149 = arith.mulf %148, %147 : vector<16x64xf32>
    %cst_56 = arith.constant 4.471500e-02 : f32
    %150 = vector.broadcast %cst_56 : f32 to vector<16x64xf32>
    %151 = arith.mulf %150, %147 : vector<16x64xf32>
    %152 = arith.mulf %151, %147 : vector<16x64xf32>
    %153 = arith.mulf %152, %147 : vector<16x64xf32>
    %154 = arith.addf %147, %153 : vector<16x64xf32>
    %cst_57 = arith.constant 0.797884583 : f32
    %155 = vector.broadcast %cst_57 : f32 to vector<16x64xf32>
    %156 = arith.mulf %155, %154 : vector<16x64xf32>
    %157 = math.tanh %156 : vector<16x64xf32>
    %cst_58 = arith.constant 1.000000e+00 : f32
    %158 = vector.broadcast %cst_58 : f32 to vector<16x64xf32>
    %159 = arith.addf %158, %157 : vector<16x64xf32>
    %160 = arith.mulf %149, %159 : vector<16x64xf32>
    %c0_59 = arith.constant 0 : index
    %c0_60 = arith.constant 0 : index
    %c0_61 = arith.constant 0 : index
    %161 = vector.load %arg13[%c0_59, %c0_60, %c0_61] : memref<1x64x32xf32, #tpu.memory_space<vmem>>, vector<1x64x32xf32>
    %162 = vector.shape_cast %161 : vector<1x64x32xf32> to vector<64x32xf32>
    %163 = arith.truncf %160 : vector<16x64xf32> to vector<16x64xbf16>
    %164 = arith.truncf %162 : vector<64x32xf32> to vector<64x32xbf16>
    %cst_62 = arith.constant dense<0.000000e+00> : vector<16x32xf32>
    %165 = tpu.matmul %163, %164, %cst_62 {dimension_numbers = #tpu.dot_dimension_numbers<[1], [0], [0], [1], [0, 0, 1, 1], [], []>} : vector<16x64xbf16>, vector<64x32xbf16>, vector<16x32xf32> -> vector<16x32xf32>
    %c0_63 = arith.constant 0 : index
    %c0_64 = arith.constant 0 : index
    %c0_65 = arith.constant 0 : index
    %166 = vector.load %arg14[%c0_63, %c0_64, %c0_65] : memref<1x1x32xf32, #tpu.memory_space<vmem>>, vector<1x1x32xf32>
    %167 = vector.shape_cast %166 : vector<1x1x32xf32> to vector<1x32xf32>
    %168 = vector.broadcast %167 : vector<1x32xf32> to vector<16x32xf32>
    %169 = arith.addf %165, %168 : vector<16x32xf32>
    %170 = arith.addf %169, %138 : vector<16x32xf32>
    %c0_66 = arith.constant 0 : index
    %c0_67 = arith.constant 0 : index
    %c0_68 = arith.constant 0 : index
    %171 = vector.load %arg15[%c0_66, %c0_67, %c0_68] : memref<1x1x32xf32, #tpu.memory_space<vmem>>, vector<1x1x32xf32>
    %172 = vector.shape_cast %171 : vector<1x1x32xf32> to vector<1x32xf32>
    %c0_69 = arith.constant 0 : index
    %c0_70 = arith.constant 0 : index
    %c0_71 = arith.constant 0 : index
    %173 = vector.load %arg16[%c0_69, %c0_70, %c0_71] : memref<1x1x32xf32, #tpu.memory_space<vmem>>, vector<1x1x32xf32>
    %174 = vector.shape_cast %173 : vector<1x1x32xf32> to vector<1x32xf32>
    %cst_72 = arith.constant dense<0.000000e+00> : vector<16xf32>
    %175 = vector.multi_reduction <add>, %170, %cst_72 [1] : vector<16x32xf32> to vector<16xf32>
    %176 = vector.shape_cast %175 : vector<16xf32> to vector<16x1xf32>
    %cst_73 = arith.constant 3.200000e+01 : f32
    %177 = vector.broadcast %cst_73 : f32 to vector<16x1xf32>
    %178 = arith.divf %176, %177 : vector<16x1xf32>
    %179 = vector.broadcast %178 : vector<16x1xf32> to vector<16x32xf32>
    %180 = arith.subf %170, %179 : vector<16x32xf32>
    %181 = arith.mulf %180, %180 : vector<16x32xf32>
    %cst_74 = arith.constant dense<0.000000e+00> : vector<16xf32>
    %182 = vector.multi_reduction <add>, %181, %cst_74 [1] : vector<16x32xf32> to vector<16xf32>
    %183 = vector.shape_cast %182 : vector<16xf32> to vector<16x1xf32>
    %cst_75 = arith.constant 3.200000e+01 : f32
    %184 = vector.broadcast %cst_75 : f32 to vector<16x1xf32>
    %185 = arith.divf %183, %184 : vector<16x1xf32>
    %186 = vector.broadcast %178 : vector<16x1xf32> to vector<16x32xf32>
    %187 = arith.subf %170, %186 : vector<16x32xf32>
    %cst_76 = arith.constant 9.99999996E-13 : f32
    %188 = vector.broadcast %cst_76 : f32 to vector<16x1xf32>
    %189 = arith.addf %185, %188 : vector<16x1xf32>
    %190 = math.rsqrt %189 : vector<16x1xf32>
    %191 = vector.broadcast %190 : vector<16x1xf32> to vector<16x32xf32>
    %192 = arith.mulf %187, %191 : vector<16x32xf32>
    %193 = vector.broadcast %172 : vector<1x32xf32> to vector<16x32xf32>
    %194 = arith.mulf %192, %193 : vector<16x32xf32>
    %195 = vector.broadcast %174 : vector<1x32xf32> to vector<16x32xf32>
    %196 = arith.addf %194, %195 : vector<16x32xf32>
    %c0_77 = arith.constant 0 : index
    %c0_78 = arith.constant 0 : index
    %197 = vector.load %arg20[%c0_77, %c0_78] : memref<16x32xf32, #tpu.memory_space<vmem>>, vector<16x32xf32>
    tpu.vector_store %arg20[%c0_77, %c0_78], %196 {strides = array<i32>} : memref<16x32xf32, #tpu.memory_space<vmem>>, vector<16x32xf32>,
    %c1_i32 = arith.constant 1 : i32
    %198 = arith.cmpi eq, %arg0, %c1_i32 : i32
    %199 = arith.extui %198 : i1 to i32
    %c0_i32_79 = arith.constant 0 : i32
    %200 = arith.cmpi ne, %199, %c0_i32_79 : i32
    scf.if %200 {
      %c0_80 = arith.constant 0 : index
      %c0_81 = arith.constant 0 : index
      %201 = vector.load %arg17[%c0_80, %c0_81] : memref<32x128xf32, #tpu.memory_space<vmem>>, vector<32x128xf32>
      %202 = arith.truncf %196 : vector<16x32xf32> to vector<16x32xbf16>
      %203 = arith.truncf %201 : vector<32x128xf32> to vector<32x128xbf16>
      %cst_82 = arith.constant dense<0.000000e+00> : vector<16x128xf32>
      %204 = tpu.matmul %202, %203, %cst_82 {dimension_numbers = #tpu.dot_dimension_numbers<[1], [0], [0], [1], [0, 0, 1, 1], [], []>} : vector<16x32xbf16>, vector<32x128xbf16>, vector<16x128xf32> -> vector<16x128xf32>
      %c0_83 = arith.constant 0 : index
      %c0_84 = arith.constant 0 : index
      %205 = vector.load %arg18[%c0_83, %c0_84] : memref<1x128xf32, #tpu.memory_space<vmem>>, vector<1x128xf32>
      %206 = vector.broadcast %205 : vector<1x128xf32> to vector<16x128xf32>
      %207 = arith.addf %204, %206 : vector<16x128xf32>
      %c0_85 = arith.constant 0 : index
      %c0_86 = arith.constant 0 : index
      %208 = vector.load %arg19[%c0_85, %c0_86] : memref<16x128xf32, #tpu.memory_space<vmem>>, vector<16x128xf32>
      tpu.vector_store %arg19[%c0_85, %c0_86], %207 {strides = array<i32>} : memref<16x128xf32, #tpu.memory_space<vmem>>, vector<16x128xf32>,
    } else {
    }
    return
  }
  func.func @transform_0(%arg0: i32) -> (i32, i32) {
    %c0_i32 = arith.constant 0 : i32
    %c0_i32_0 = arith.constant 0 : i32
    %c0_i32_1 = arith.constant 0 : i32
    return %c0_i32, %c0_i32_0 : i32, i32
  }
  func.func @transform_1(%arg0: i32) -> (i32, i32) {
    %c0_i32 = arith.constant 0 : i32
    %c0_i32_0 = arith.constant 0 : i32
    %c0_i32_1 = arith.constant 0 : i32
    return %c0_i32, %c0_i32_0 : i32, i32
  }
  func.func @transform_2(%arg0: i32) -> (i32, i32) {
    %c0_i32 = arith.constant 0 : i32
    %c0_i32_0 = arith.constant 0 : i32
    %c0_i32_1 = arith.constant 0 : i32
    return %c0_i32, %c0_i32_0 : i32, i32
  }
  func.func @transform_3(%arg0: i32) -> (i32, i32) {
    %c0_i32 = arith.constant 0 : i32
    %c0_i32_0 = arith.constant 0 : i32
    %c0_i32_1 = arith.constant 0 : i32
    return %c0_i32, %c0_i32_0 : i32, i32
  }
  func.func @transform_4(%arg0: i32) -> (i32, i32, i32) {
    %c0_i32 = arith.constant 0 : i32
    %c0_i32_0 = arith.constant 0 : i32
    %c0_i32_1 = arith.constant 0 : i32
    return %arg0, %c0_i32, %c0_i32_0 : i32, i32, i32
  }
  func.func @transform_5(%arg0: i32) -> (i32, i32, i32) {
    %c0_i32 = arith.constant 0 : i32
    %c0_i32_0 = arith.constant 0 : i32
    %c0_i32_1 = arith.constant 0 : i32
    return %arg0, %c0_i32, %c0_i32_0 : i32, i32, i32
  }
  func.func @transform_6(%arg0: i32) -> (i32, i32, i32) {
    %c0_i32 = arith.constant 0 : i32
    %c0_i32_0 = arith.constant 0 : i32
    %c0_i32_1 = arith.constant 0 : i32
    return %arg0, %c0_i32, %c0_i32_0 : i32, i32, i32
  }
  func.func @transform_7(%arg0: i32) -> (i32, i32, i32) {
    %c0_i32 = arith.constant 0 : i32
    %c0_i32_0 = arith.constant 0 : i32
    %c0_i32_1 = arith.constant 0 : i32
    return %arg0, %c0_i32, %c0_i32_0 : i32, i32, i32
  }
  func.func @transform_8(%arg0: i32) -> (i32, i32, i32) {
    %c0_i32 = arith.constant 0 : i32
    %c0_i32_0 = arith.constant 0 : i32
    %c0_i32_1 = arith.constant 0 : i32
    return %arg0, %c0_i32, %c0_i32_0 : i32, i32, i32
  }
  func.func @transform_9(%arg0: i32) -> (i32, i32, i32) {
    %c0_i32 = arith.constant 0 : i32
    %c0_i32_0 = arith.constant 0 : i32
    %c0_i32_1 = arith.constant 0 : i32
    return %arg0, %c0_i32, %c0_i32_0 : i32, i32, i32
  }
  func.func @transform_10(%arg0: i32) -> (i32, i32, i32) {
    %c0_i32 = arith.constant 0 : i32
    %c0_i32_0 = arith.constant 0 : i32
    %c0_i32_1 = arith.constant 0 : i32
    return %arg0, %c0_i32, %c0_i32_0 : i32, i32, i32
  }
  func.func @transform_11(%arg0: i32) -> (i32, i32, i32) {
    %c0_i32 = arith.constant 0 : i32
    %c0_i32_0 = arith.constant 0 : i32
    %c0_i32_1 = arith.constant 0 : i32
    return %arg0, %c0_i32, %c0_i32_0 : i32, i32, i32
  }
  func.func @transform_12(%arg0: i32) -> (i32, i32, i32) {
    %c0_i32 = arith.constant 0 : i32
    %c0_i32_0 = arith.constant 0 : i32
    %c0_i32_1 = arith.constant 0 : i32
    return %arg0, %c0_i32, %c0_i32_0 : i32, i32, i32
  }
  func.func @transform_13(%arg0: i32) -> (i32, i32, i32) {
    %c0_i32 = arith.constant 0 : i32
    %c0_i32_0 = arith.constant 0 : i32
    %c0_i32_1 = arith.constant 0 : i32
    return %arg0, %c0_i32, %c0_i32_0 : i32, i32, i32
  }
  func.func @transform_14(%arg0: i32) -> (i32, i32, i32) {
    %c0_i32 = arith.constant 0 : i32
    %c0_i32_0 = arith.constant 0 : i32
    %c0_i32_1 = arith.constant 0 : i32
    return %arg0, %c0_i32, %c0_i32_0 : i32, i32, i32
  }
  func.func @transform_15(%arg0: i32) -> (i32, i32, i32) {
    %c0_i32 = arith.constant 0 : i32
    %c0_i32_0 = arith.constant 0 : i32
    %c0_i32_1 = arith.constant 0 : i32
    return %arg0, %c0_i32, %c0_i32_0 : i32, i32, i32
  }
  func.func @transform_16(%arg0: i32) -> (i32, i32) {
    %c0_i32 = arith.constant 0 : i32
    %c0_i32_0 = arith.constant 0 : i32
    %c0_i32_1 = arith.constant 0 : i32
    return %c0_i32, %c0_i32_0 : i32, i32
  }
  func.func @transform_17(%arg0: i32) -> (i32, i32) {
    %c0_i32 = arith.constant 0 : i32
    %c0_i32_0 = arith.constant 0 : i32
    %c0_i32_1 = arith.constant 0 : i32
    return %c0_i32, %c0_i32_0 : i32, i32
  }
  func.func @transform_18(%arg0: i32) -> (i32, i32) {
    %c0_i32 = arith.constant 0 : i32
    %c0_i32_0 = arith.constant 0 : i32
    %c0_i32_1 = arith.constant 0 : i32
    return %c0_i32, %c0_i32_0 : i32, i32
  }
}

</mosaic_0001>

<llo_original>
// kernel: custom-call.24
$region0: #{custom-call.24}
  %s0 = inlined_call_operand.vmem [shape: s32[7,2,5], index: 0, kind: output, shape index: {}]

// kernel: model_forward.1
$region0: #{model_forward.1}
  #allocation0 [shape = 'u32[]', space=smem, size = 0x4, offset = 0x4, fixed_abs, tag = 'smem constant byte address 0x4 - core index']
  #allocation1 [shape = 'u32[144,128]{1,0:T(1,128)}', space=vmem, size = 0x12000, scoped, tag = 'internal scratch']
  #allocation2 [shape = 'f32[16,32]{1,0:T(8,128)}', space=vmem, size = 0x2000, scoped, tag = 'scratch operand']
  %s0 = inlined_call_operand.vmem [shape: f32[16,32], index: 0, kind: input, shape index: {}]
  %s1 = inlined_call_operand.vmem [shape: f32[16,16], index: 1, kind: input, shape index: {}]
  %s2 = inlined_call_operand.vmem [shape: f32[1,32], index: 2, kind: input, shape index: {}]
  %s3 = inlined_call_operand.vmem [shape: f32[1,32], index: 3, kind: input, shape index: {}]
  %s4 = inlined_call_operand.vmem [shape: f32[2,32,96], index: 4, kind: input, shape index: {}]
  %s5 = inlined_call_operand.vmem [shape: f32[2,1,96], index: 5, kind: input, shape index: {}]
  %s6 = inlined_call_operand.vmem [shape: f32[2,32,32], index: 6, kind: input, shape index: {}]
  %s7 = inlined_call_operand.vmem [shape: f32[2,1,32], index: 7, kind: input, shape index: {}]
  %s8 = inlined_call_operand.vmem [shape: f32[2,1,32], index: 8, kind: input, shape index: {}]
  %s9 = inlined_call_operand.vmem [shape: f32[2,1,32], index: 9, kind: input, shape index: {}]
  %s10 = inlined_call_operand.vmem [shape: f32[2,32,64], index: 10, kind: input, shape index: {}]
  %s11 = inlined_call_operand.vmem [shape: f32[2,1,64], index: 11, kind: input, shape index: {}]
  %s12 = inlined_call_operand.vmem [shape: f32[2,64,32], index: 12, kind: input, shape index: {}]
  %s13 = inlined_call_operand.vmem [shape: f32[2,1,32], index: 13, kind: input, shape index: {}]
  %s14 = inlined_call_operand.vmem [shape: f32[2,1,32], index: 14, kind: input, shape index: {}]
  %s15 = inlined_call_operand.vmem [shape: f32[2,1,32], index: 15, kind: input, shape index: {}]
  %s16 = inlined_call_operand.vmem [shape: f32[32,128], index: 16, kind: input, shape index: {}]
  %s17 = inlined_call_operand.vmem [shape: f32[1,128], index: 17, kind: input, shape index: {}]
  %s18 = inlined_call_operand.vmem [shape: f32[16,128], index: 18, kind: output, shape index: {}]
  %s19 = sld [smem:[#allocation0]]
  $region113: #{model_forward.1} parent=0
    _
  %s21 = ssub.s32 1, %s19
  %s22 = scalar_select 0, %s21, %s19
  loop: start=0, step=1, limit=4
  $region2: #{model_forward.1} parent=0 // loop_pre_header
    _
  $region3: #{model_forward.1} parent=0 // loop_header
    %s24 = sphi 0, %s28
    %p25 = scmp.ge.s32.totalorder %s24, 4
    %s32 = sphi 0, %s32
    %s34 = sphi 0, %s32
    %s35 = sphi 0, %s34
    %s49 = sphi 0, %s35
    %s53 = sphi 0, %s53
    %s55 = sphi 0, %s53
    %s56 = sphi 0, %s55
    %s70 = sphi 0, %s56
    %s74 = sphi 0, %s74
    %s76 = sphi 0, %s74
    %s77 = sphi 0, %s76
    %s91 = sphi 0, %s77
    %s95 = sphi 0, %s95
    %s97 = sphi 0, %s95
    %s98 = sphi 0, %s97
    %s112 = sphi 0, %s98
    %s118 = sphi 0, %s120
    %s121 = sphi 0, %s118
    %s122 = sphi 0, %s121
    %s138 = sphi 0, %s122
    %s144 = sphi 0, %s146
    %s147 = sphi 0, %s144
    %s148 = sphi 0, %s147
    %s164 = sphi 0, %s148
    %s170 = sphi 0, %s172
    %s173 = sphi 0, %s170
    %s174 = sphi 0, %s173
    %s190 = sphi 0, %s174
    %s196 = sphi 0, %s198
    %s199 = sphi 0, %s196
    %s200 = sphi 0, %s199
    %s216 = sphi 0, %s200
    %s222 = sphi 0, %s224
    %s225 = sphi 0, %s222
    %s226 = sphi 0, %s225
    %s242 = sphi 0, %s226
    %s248 = sphi 0, %s250
    %s251 = sphi 0, %s248
    %s252 = sphi 0, %s251
    %s268 = sphi 0, %s252
    %s274 = sphi 0, %s276
    %s277 = sphi 0, %s274
    %s278 = sphi 0, %s277
    %s294 = sphi 0, %s278
    %s300 = sphi 0, %s302
    %s303 = sphi 0, %s300
    %s304 = sphi 0, %s303
    %s320 = sphi 0, %s304
    %s326 = sphi 0, %s328
    %s329 = sphi 0, %s326
    %s330 = sphi 0, %s329
    %s346 = sphi 0, %s330
    %s352 = sphi 0, %s354
    %s355 = sphi 0, %s352
    %s356 = sphi 0, %s355
    %s372 = sphi 0, %s356
    %s378 = sphi 0, %s380
    %s381 = sphi 0, %s378
    %s382 = sphi 0, %s381
    %s398 = sphi 0, %s382
    %s404 = sphi 0, %s406
    %s407 = sphi 0, %s404
    %s408 = sphi 0, %s407
    %s424 = sphi 0, %s408
    %s428 = sphi 0, %s428
    %s430 = sphi 0, %s428
    %s431 = sphi 0, %s430
    %s445 = sphi 0, %s431
    %s449 = sphi 0, %s449
    %s451 = sphi 0, %s449
    %s452 = sphi 0, %s451
    %s466 = sphi 0, %s452
    %s470 = sphi 0, %s470
    %s472 = sphi 0, %s470
    %s473 = sphi 0, %s472
    %s487 = sphi 0, %s473
  $region4: #{model_forward.1} parent=0 // loop_header_branch
    %27 = sbr.rel (%p25) target = $region8
  $region5: #{model_forward.1} parent=0 // loop_body
    %s29 = ssub.s32 %s24, 1
    %s30 = ssub.s32 %s24, 2
    %s31 = sadd.s32 %s24, 1
    %s33 = sadd.s32 %s32, 1
    %p36 = scmp.eq.s32.totalorder %s24, 1
    %p37 = scmp.ne.s32.totalorder %s32, %s34
    %p38 = scmp.eq.s32.totalorder %s24, 0
    %p39 = por %p37, %p38
    %p40 = scmp.ne.s32.totalorder %s32, %s34
    %p41 = scmp.eq.s32.totalorder %s29, 1
    %p42 = por %p40, %p41
    %p43 = scmp.ne.s32.totalorder %s34, %s35
    %p44 = scmp.eq.s32.totalorder %s29, 0
    %p45 = por %p43, %p44
    %p46 = scmp.ne.s32.totalorder %s34, %s35
    %p47 = scmp.eq.s32.totalorder %s30, 1
    %p48 = por %p46, %p47
    %p50 = scmp.ne.s32.totalorder %s35, %s49
    %p51 = scmp.eq.s32.totalorder %s30, 0
    %p52 = por %p50, %p51
    %s54 = sadd.s32 %s53, 1
    %p57 = scmp.eq.s32.totalorder %s24, 1
    %p58 = scmp.ne.s32.totalorder %s53, %s55
    %p59 = scmp.eq.s32.totalorder %s24, 0
    %p60 = por %p58, %p59
    %p61 = scmp.ne.s32.totalorder %s53, %s55
    %p62 = scmp.eq.s32.totalorder %s29, 1
    %p63 = por %p61, %p62
    %p64 = scmp.ne.s32.totalorder %s55, %s56
    %p65 = scmp.eq.s32.totalorder %s29, 0
    %p66 = por %p64, %p65
    %p67 = scmp.ne.s32.totalorder %s55, %s56
    %p68 = scmp.eq.s32.totalorder %s30, 1
    %p69 = por %p67, %p68
    %p71 = scmp.ne.s32.totalorder %s56, %s70
    %p72 = scmp.eq.s32.totalorder %s30, 0
    %p73 = por %p71, %p72
    %s75 = sadd.s32 %s74, 1
    %p78 = scmp.eq.s32.totalorder %s24, 1
    %p79 = scmp.ne.s32.totalorder %s74, %s76
    %p80 = scmp.eq.s32.totalorder %s24, 0
    %p81 = por %p79, %p80
    %p82 = scmp.ne.s32.totalorder %s74, %s76
    %p83 = scmp.eq.s32.totalorder %s29, 1
    %p84 = por %p82, %p83
    %p85 = scmp.ne.s32.totalorder %s76, %s77
    %p86 = scmp.eq.s32.totalorder %s29, 0
    %p87 = por %p85, %p86
    %p88 = scmp.ne.s32.totalorder %s76, %s77
    %p89 = scmp.eq.s32.totalorder %s30, 1
    %p90 = por %p88, %p89
    %p92 = scmp.ne.s32.totalorder %s77, %s91
    %p93 = scmp.eq.s32.totalorder %s30, 0
    %p94 = por %p92, %p93
    %s96 = sadd.s32 %s95, 1
    %p99 = scmp.eq.s32.totalorder %s24, 1
    %p100 = scmp.ne.s32.totalorder %s95, %s97
    %p101 = scmp.eq.s32.totalorder %s24, 0
    %p102 = por %p100, %p101
    %p103 = scmp.ne.s32.totalorder %s95, %s97
    %p104 = scmp.eq.s32.totalorder %s29, 1
    %p105 = por %p103, %p104
    %p106 = scmp.ne.s32.totalorder %s97, %s98
    %p107 = scmp.eq.s32.totalorder %s29, 0
    %p108 = por %p106, %p107
    %p109 = scmp.ne.s32.totalorder %s97, %s98
    %p110 = scmp.eq.s32.totalorder %s30, 1
    %p111 = por %p109, %p110
    %p113 = scmp.ne.s32.totalorder %s98, %s112
    %p114 = scmp.eq.s32.totalorder %s30, 0
    %p115 = por %p113, %p114
    %s116 = ssub.s32 %s24, %s31
    %p117 = scmp.eq.s32.totalorder %s116, 0
    %s119 = sadd.s32 %s118, 1
    %s120 = scalar_select %p117, %s118, %s119
    %p123 = pneg %p117
    %p124 = scmp.eq.s32.totalorder %s24, 1
    %p125 = por %p123, %p124
    %p126 = scmp.ne.s32.totalorder %s118, %s121
    %p127 = scmp.eq.s32.totalorder %s24, 0
    %p128 = por %p126, %p127
    %p129 = scmp.ne.s32.totalorder %s118, %s121
    %p130 = scmp.eq.s32.totalorder %s29, 1
    %p131 = por %p129, %p130
    %p132 = scmp.ne.s32.totalorder %s121, %s122
    %p133 = scmp.eq.s32.totalorder %s29, 0
    %p134 = por %p132, %p133
    %p135 = scmp.ne.s32.totalorder %s121, %s122
    %p136 = scmp.eq.s32.totalorder %s30, 1
    %p137 = por %p135, %p136
    %p139 = scmp.ne.s32.totalorder %s122, %s138
    %p140 = scmp.eq.s32.totalorder %s30, 0
    %p141 = por %p139, %p140
    %s142 = ssub.s32 %s24, %s31
    %p143 = scmp.eq.s32.totalorder %s142, 0
    %s145 = sadd.s32 %s144, 1
    %s146 = scalar_select %p143, %s144, %s145
    %p149 = pneg %p143
    %p150 = scmp.eq.s32.totalorder %s24, 1
    %p151 = por %p149, %p150
    %p152 = scmp.ne.s32.totalorder %s144, %s147
    %p153 = scmp.eq.s32.totalorder %s24, 0
    %p154 = por %p152, %p153
    %p155 = scmp.ne.s32.totalorder %s144, %s147
    %p156 = scmp.eq.s32.totalorder %s29, 1
    %p157 = por %p155, %p156
    %p158 = scmp.ne.s32.totalorder %s147, %s148
    %p159 = scmp.eq.s32.totalorder %s29, 0
    %p160 = por %p158, %p159
    %p161 = scmp.ne.s32.totalorder %s147, %s148
    %p162 = scmp.eq.s32.totalorder %s30, 1
    %p163 = por %p161, %p162
    %p165 = scmp.ne.s32.totalorder %s148, %s164
    %p166 = scmp.eq.s32.totalorder %s30, 0
    %p167 = por %p165, %p166
    %s168 = ssub.s32 %s24, %s31
    %p169 = scmp.eq.s32.totalorder %s168, 0
    %s171 = sadd.s32 %s170, 1
    %s172 = scalar_select %p169, %s170, %s171
    %p175 = pneg %p169
    %p176 = scmp.eq.s32.totalorder %s24, 1
    %p177 = por %p175, %p176
    %p178 = scmp.ne.s32.totalorder %s170, %s173
    %p179 = scmp.eq.s32.totalorder %s24, 0
    %p180 = por %p178, %p179
    %p181 = scmp.ne.s32.totalorder %s170, %s173
    %p182 = scmp.eq.s32.totalorder %s29, 1
    %p183 = por %p181, %p182
    %p184 = scmp.ne.s32.totalorder %s173, %s174
    %p185 = scmp.eq.s32.totalorder %s29, 0
    %p186 = por %p184, %p185
    %p187 = scmp.ne.s32.totalorder %s173, %s174
    %p188 = scmp.eq.s32.totalorder %s30, 1
    %p189 = por %p187, %p188
    %p191 = scmp.ne.s32.totalorder %s174, %s190
    %p192 = scmp.eq.s32.totalorder %s30, 0
    %p193 = por %p191, %p192
    %s194 = ssub.s32 %s24, %s31
    %p195 = scmp.eq.s32.totalorder %s194, 0
    %s197 = sadd.s32 %s196, 1
    %s198 = scalar_select %p195, %s196, %s197
    %p201 = pneg %p195
    %p202 = scmp.eq.s32.totalorder %s24, 1
    %p203 = por %p201, %p202
    %p204 = scmp.ne.s32.totalorder %s196, %s199
    %p205 = scmp.eq.s32.totalorder %s24, 0
    %p206 = por %p204, %p205
    %p207 = scmp.ne.s32.totalorder %s196, %s199
    %p208 = scmp.eq.s32.totalorder %s29, 1
    %p209 = por %p207, %p208
    %p210 = scmp.ne.s32.totalorder %s199, %s200
    %p211 = scmp.eq.s32.totalorder %s29, 0
    %p212 = por %p210, %p211
    %p213 = scmp.ne.s32.totalorder %s199, %s200
    %p214 = scmp.eq.s32.totalorder %s30, 1
    %p215 = por %p213, %p214
    %p217 = scmp.ne.s32.totalorder %s200, %s216
    %p218 = scmp.eq.s32.totalorder %s30, 0
    %p219 = por %p217, %p218
    %s220 = ssub.s32 %s24, %s31
    %p221 = scmp.eq.s32.totalorder %s220, 0
    %s223 = sadd.s32 %s222, 1
    %s224 = scalar_select %p221, %s222, %s223
    %p227 = pneg %p221
    %p228 = scmp.eq.s32.totalorder %s24, 1
    %p229 = por %p227, %p228
    %p230 = scmp.ne.s32.totalorder %s222, %s225
    %p231 = scmp.eq.s32.totalorder %s24, 0
    %p232 = por %p230, %p231
    %p233 = scmp.ne.s32.totalorder %s222, %s225
    %p234 = scmp.eq.s32.totalorder %s29, 1
    %p235 = por %p233, %p234
    %p236 = scmp.ne.s32.totalorder %s225, %s226
    %p237 = scmp.eq.s32.totalorder %s29, 0
    %p238 = por %p236, %p237
    %p239 = scmp.ne.s32.totalorder %s225, %s226
    %p240 = scmp.eq.s32.totalorder %s30, 1
    %p241 = por %p239, %p240
    %p243 = scmp.ne.s32.totalorder %s226, %s242
    %p244 = scmp.eq.s32.totalorder %s30, 0
    %p245 = por %p243, %p244
    %s246 = ssub.s32 %s24, %s31
    %p247 = scmp.eq.s32.totalorder %s246, 0
    %s249 = sadd.s32 %s248, 1
    %s250 = scalar_select %p247, %s248, %s249
    %p253 = pneg %p247
    %p254 = scmp.eq.s32.totalorder %s24, 1
    %p255 = por %p253, %p254
    %p256 = scmp.ne.s32.totalorder %s248, %s251
    %p257 = scmp.eq.s32.totalorder %s24, 0
    %p258 = por %p256, %p257
    %p259 = scmp.ne.s32.totalorder %s248, %s251
    %p260 = scmp.eq.s32.totalorder %s29, 1
    %p261 = por %p259, %p260
    %p262 = scmp.ne.s32.totalorder %s251, %s252
    %p263 = scmp.eq.s32.totalorder %s29, 0
    %p264 = por %p262, %p263
    %p265 = scmp.ne.s32.totalorder %s251, %s252
    %p266 = scmp.eq.s32.totalorder %s30, 1
    %p267 = por %p265, %p266
    %p269 = scmp.ne.s32.totalorder %s252, %s268
    %p270 = scmp.eq.s32.totalorder %s30, 0
    %p271 = por %p269, %p270
    %s272 = ssub.s32 %s24, %s31
    %p273 = scmp.eq.s32.totalorder %s272, 0
    %s275 = sadd.s32 %s274, 1
    %s276 = scalar_select %p273, %s274, %s275
    %p279 = pneg %p273
    %p280 = scmp.eq.s32.totalorder %s24, 1
    %p281 = por %p279, %p280
    %p282 = scmp.ne.s32.totalorder %s274, %s277
    %p283 = scmp.eq.s32.totalorder %s24, 0
    %p284 = por %p282, %p283
    %p285 = scmp.ne.s32.totalorder %s274, %s277
    %p286 = scmp.eq.s32.totalorder %s29, 1
    %p287 = por %p285, %p286
    %p288 = scmp.ne.s32.totalorder %s277, %s278
    %p289 = scmp.eq.s32.totalorder %s29, 0
    %p290 = por %p288, %p289
    %p291 = scmp.ne.s32.totalorder %s277, %s278
    %p292 = scmp.eq.s32.totalorder %s30, 1
    %p293 = por %p291, %p292
    %p295 = scmp.ne.s32.totalorder %s278, %s294
    %p296 = scmp.eq.s32.totalorder %s30, 0
    %p297 = por %p295, %p296
    %s298 = ssub.s32 %s24, %s31
    %p299 = scmp.eq.s32.totalorder %s298, 0
    %s301 = sadd.s32 %s300, 1
    %s302 = scalar_select %p299, %s300, %s301
    %p305 = pneg %p299
    %p306 = scmp.eq.s32.totalorder %s24, 1
    %p307 = por %p305, %p306
    %p308 = scmp.ne.s32.totalorder %s300, %s303
    %p309 = scmp.eq.s32.totalorder %s24, 0
    %p310 = por %p308, %p309
    %p311 = scmp.ne.s32.totalorder %s300, %s303
    %p312 = scmp.eq.s32.totalorder %s29, 1
    %p313 = por %p311, %p312
    %p314 = scmp.ne.s32.totalorder %s303, %s304
    %p315 = scmp.eq.s32.totalorder %s29, 0
    %p316 = por %p314, %p315
    %p317 = scmp.ne.s32.totalorder %s303, %s304
    %p318 = scmp.eq.s32.totalorder %s30, 1
    %p319 = por %p317, %p318
    %p321 = scmp.ne.s32.totalorder %s304, %s320
    %p322 = scmp.eq.s32.totalorder %s30, 0
    %p323 = por %p321, %p322
    %s324 = ssub.s32 %s24, %s31
    %p325 = scmp.eq.s32.totalorder %s324, 0
    %s327 = sadd.s32 %s326, 1
    %s328 = scalar_select %p325, %s326, %s327
    %p331 = pneg %p325
    %p332 = scmp.eq.s32.totalorder %s24, 1
    %p333 = por %p331, %p332
    %p334 = scmp.ne.s32.totalorder %s326, %s329
    %p335 = scmp.eq.s32.totalorder %s24, 0
    %p336 = por %p334, %p335
    %p337 = scmp.ne.s32.totalorder %s326, %s329
    %p338 = scmp.eq.s32.totalorder %s29, 1
    %p339 = por %p337, %p338
    %p340 = scmp.ne.s32.totalorder %s329, %s330
    %p341 = scmp.eq.s32.totalorder %s29, 0
    %p342 = por %p340, %p341
    %p343 = scmp.ne.s32.totalorder %s329, %s330
    %p344 = scmp.eq.s32.totalorder %s30, 1
    %p345 = por %p343, %p344
    %p347 = scmp.ne.s32.totalorder %s330, %s346
    %p348 = scmp.eq.s32.totalorder %s30, 0
    %p349 = por %p347, %p348
    %s350 = ssub.s32 %s24, %s31
    %p351 = scmp.eq.s32.totalorder %s350, 0
    %s353 = sadd.s32 %s352, 1
    %s354 = scalar_select %p351, %s352, %s353
    %p357 = pneg %p351
    %p358 = scmp.eq.s32.totalorder %s24, 1
    %p359 = por %p357, %p358
    %p360 = scmp.ne.s32.totalorder %s352, %s355
    %p361 = scmp.eq.s32.totalorder %s24, 0
    %p362 = por %p360, %p361
    %p363 = scmp.ne.s32.totalorder %s352, %s355
    %p364 = scmp.eq.s32.totalorder %s29, 1
    %p365 = por %p363, %p364
    %p366 = scmp.ne.s32.totalorder %s355, %s356
    %p367 = scmp.eq.s32.totalorder %s29, 0
    %p368 = por %p366, %p367
    %p369 = scmp.ne.s32.totalorder %s355, %s356
    %p370 = scmp.eq.s32.totalorder %s30, 1
    %p371 = por %p369, %p370
    %p373 = scmp.ne.s32.totalorder %s356, %s372
    %p374 = scmp.eq.s32.totalorder %s30, 0
    %p375 = por %p373, %p374
    %s376 = ssub.s32 %s24, %s31
    %p377 = scmp.eq.s32.totalorder %s376, 0
    %s379 = sadd.s32 %s378, 1
    %s380 = scalar_select %p377, %s378, %s379
    %p383 = pneg %p377
    %p384 = scmp.eq.s32.totalorder %s24, 1
    %p385 = por %p383, %p384
    %p386 = scmp.ne.s32.totalorder %s378, %s381
    %p387 = scmp.eq.s32.totalorder %s24, 0
    %p388 = por %p386, %p387
    %p389 = scmp.ne.s32.totalorder %s378, %s381
    %p390 = scmp.eq.s32.totalorder %s29, 1
    %p391 = por %p389, %p390
    %p392 = scmp.ne.s32.totalorder %s381, %s382
    %p393 = scmp.eq.s32.totalorder %s29, 0
    %p394 = por %p392, %p393
    %p395 = scmp.ne.s32.totalorder %s381, %s382
    %p396 = scmp.eq.s32.totalorder %s30, 1
    %p397 = por %p395, %p396
    %p399 = scmp.ne.s32.totalorder %s382, %s398
    %p400 = scmp.eq.s32.totalorder %s30, 0
    %p401 = por %p399, %p400
    %s402 = ssub.s32 %s24, %s31
    %p403 = scmp.eq.s32.totalorder %s402, 0
    %s405 = sadd.s32 %s404, 1
    %s406 = scalar_select %p403, %s404, %s405
    %p409 = pneg %p403
    %p410 = scmp.eq.s32.totalorder %s24, 1
    %p411 = por %p409, %p410
    %p412 = scmp.ne.s32.totalorder %s404, %s407
    %p413 = scmp.eq.s32.totalorder %s24, 0
    %p414 = por %p412, %p413
    %p415 = scmp.ne.s32.totalorder %s404, %s407
    %p416 = scmp.eq.s32.totalorder %s29, 1
    %p417 = por %p415, %p416
    %p418 = scmp.ne.s32.totalorder %s407, %s408
    %p419 = scmp.eq.s32.totalorder %s29, 0
    %p420 = por %p418, %p419
    %p421 = scmp.ne.s32.totalorder %s407, %s408
    %p422 = scmp.eq.s32.totalorder %s30, 1
    %p423 = por %p421, %p422
    %p425 = scmp.ne.s32.totalorder %s408, %s424
    %p426 = scmp.eq.s32.totalorder %s30, 0
    %p427 = por %p425, %p426
    %s429 = sadd.s32 %s428, 1
    %p432 = scmp.eq.s32.totalorder %s24, 1
    %p433 = scmp.ne.s32.totalorder %s428, %s430
    %p434 = scmp.eq.s32.totalorder %s24, 0
    %p435 = por %p433, %p434
    %p436 = scmp.ne.s32.totalorder %s428, %s430
    %p437 = scmp.eq.s32.totalorder %s29, 1
    %p438 = por %p436, %p437
    %p439 = scmp.ne.s32.totalorder %s430, %s431
    %p440 = scmp.eq.s32.totalorder %s29, 0
    %p441 = por %p439, %p440
    %p442 = scmp.ne.s32.totalorder %s430, %s431
    %p443 = scmp.eq.s32.totalorder %s30, 1
    %p444 = por %p442, %p443
    %p446 = scmp.ne.s32.totalorder %s431, %s445
    %p447 = scmp.eq.s32.totalorder %s30, 0
    %p448 = por %p446, %p447
    %s450 = sadd.s32 %s449, 1
    %p453 = scmp.eq.s32.totalorder %s24, 1
    %p454 = scmp.ne.s32.totalorder %s449, %s451
    %p455 = scmp.eq.s32.totalorder %s24, 0
    %p456 = por %p454, %p455
    %p457 = scmp.ne.s32.totalorder %s449, %s451
    %p458 = scmp.eq.s32.totalorder %s29, 1
    %p459 = por %p457, %p458
    %p460 = scmp.ne.s32.totalorder %s451, %s452
    %p461 = scmp.eq.s32.totalorder %s29, 0
    %p462 = por %p460, %p461
    %p463 = scmp.ne.s32.totalorder %s451, %s452
    %p464 = scmp.eq.s32.totalorder %s30, 1
    %p465 = por %p463, %p464
    %p467 = scmp.ne.s32.totalorder %s452, %s466
    %p468 = scmp.eq.s32.totalorder %s30, 0
    %p469 = por %p467, %p468
    %s471 = sadd.s32 %s470, 1
    %p474 = scmp.eq.s32.totalorder %s24, 1
    %p475 = scmp.ne.s32.totalorder %s470, %s472
    %p476 = scmp.eq.s32.totalorder %s24, 0
    %p477 = por %p475, %p476
    %p478 = scmp.ne.s32.totalorder %s470, %s472
    %p479 = scmp.eq.s32.totalorder %s29, 1
    %p480 = por %p478, %p479
    %p481 = scmp.ne.s32.totalorder %s472, %s473
    %p482 = scmp.eq.s32.totalorder %s29, 0
    %p483 = por %p481, %p482
    %p484 = scmp.ne.s32.totalorder %s472, %s473
    %p485 = scmp.eq.s32.totalorder %s30, 1
    %p486 = por %p484, %p485
    %p488 = scmp.ne.s32.totalorder %s473, %s487
    %p489 = scmp.eq.s32.totalorder %s30, 0
    %p490 = por %p488, %p489
    %p491 = scmp.le.s32.totalorder 1, %s24
    %p492 = scmp.lt.s32.totalorder %s24, 3
    %p493 = pnand %p491, %p492
    %p494 = pneg %p493
    // Predicated region
    $region9: #{model_forward.1} parent=5 // pred_check
      _
    $region10: #{model_forward.1} parent=5 // pred_check_branch
      %496 = sbr.rel (%p493) target = $region12
    $region11: #{model_forward.1} parent=5 // pred_region
      %s497 = ssub.s32 %s24, 1
      // Predicated region
      $region13: #{model_forward.1} parent=11 // pred_check
        %p498 = pneg %p45
      $region14: #{model_forward.1} parent=11 // pred_check_branch
        %500 = sbr.rel (%p498) target = $region16
      $region15: #{model_forward.1} parent=11 // pred_region
        _
      $region16: #{model_forward.1} parent=11 // pred_fallthru
        _
      // Predicated region
      $region17: #{model_forward.1} parent=11 // pred_check
        %p501 = pneg %p66
      $region18: #{model_forward.1} parent=11 // pred_check_branch
        %503 = sbr.rel (%p501) target = $region20
      $region19: #{model_forward.1} parent=11 // pred_region
        _
      $region20: #{model_forward.1} parent=11 // pred_fallthru
        _
      // Predicated region
      $region21: #{model_forward.1} parent=11 // pred_check
        %p504 = pneg %p87
      $region22: #{model_forward.1} parent=11 // pred_check_branch
        %506 = sbr.rel (%p504) target = $region24
      $region23: #{model_forward.1} parent=11 // pred_region
        _
      $region24: #{model_forward.1} parent=11 // pred_fallthru
        _
      // Predicated region
      $region25: #{model_forward.1} parent=11 // pred_check
        %p507 = pneg %p108
      $region26: #{model_forward.1} parent=11 // pred_check_branch
        %509 = sbr.rel (%p507) target = $region28
      $region27: #{model_forward.1} parent=11 // pred_region
        _
      $region28: #{model_forward.1} parent=11 // pred_fallthru
        _
      // Predicated region
      $region29: #{model_forward.1} parent=11 // pred_check
        %p510 = pneg %p441
      $region30: #{model_forward.1} parent=11 // pred_check_branch
        %512 = sbr.rel (%p510) target = $region32
      $region31: #{model_forward.1} parent=11 // pred_region
        _
      $region32: #{model_forward.1} parent=11 // pred_fallthru
        _
      // Predicated region
      $region33: #{model_forward.1} parent=11 // pred_check
        %p513 = pneg %p462
      $region34: #{model_forward.1} parent=11 // pred_check_branch
        %515 = sbr.rel (%p513) target = $region36
      $region35: #{model_forward.1} parent=11 // pred_region
        _
      $region36: #{model_forward.1} parent=11 // pred_fallthru
        _
    $region12: #{model_forward.1} parent=5 // pred_fallthru
      _
    %p516 = scmp.lt.s32.totalorder %s24, 2
    // Predicated region
    $region37: #{model_forward.1} parent=5 // pred_check
      %p517 = pneg %p516
    $region38: #{model_forward.1} parent=5 // pred_check_branch
      %519 = sbr.rel (%p517) target = $region40
    $region39: #{model_forward.1} parent=5 // pred_region
      // Predicated region
      $region41: #{model_forward.1} parent=39 // pred_check
        %p520 = pneg %p128
      $region42: #{model_forward.1} parent=39 // pred_check_branch
        %522 = sbr.rel (%p520) target = $region44
      $region43: #{model_forward.1} parent=39 // pred_region
        %p523 = scmp.lt.s32.totalorder %s24, 1
        %s524 = scalar_select %p523, %s24, 1
        %s525 = smul.addr %s524, 4
        %s526 = smul.addr %s525, 8
        %s527 = scalar_lea.vmem %s4, %s526
      $region44: #{model_forward.1} parent=39 // pred_fallthru
        _
      // Predicated region
      $region45: #{model_forward.1} parent=39 // pred_check
        %p528 = pneg %p154
      $region46: #{model_forward.1} parent=39 // pred_check_branch
        %530 = sbr.rel (%p528) target = $region48
      $region47: #{model_forward.1} parent=39 // pred_region
        %p531 = scmp.lt.s32.totalorder %s24, 1
        %s532 = scalar_select %p531, %s24, 1
        %s533 = scalar_lea.vmem %s5, %s532
      $region48: #{model_forward.1} parent=39 // pred_fallthru
        _
      // Predicated region
      $region49: #{model_forward.1} parent=39 // pred_check
        %p534 = pneg %p180
      $region50: #{model_forward.1} parent=39 // pred_check_branch
        %536 = sbr.rel (%p534) target = $region52
      $region51: #{model_forward.1} parent=39 // pred_region
        %p537 = scmp.lt.s32.totalorder %s24, 1
        %s538 = scalar_select %p537, %s24, 1
        %s539 = smul.addr %s538, 4
        %s540 = smul.addr %s539, 8
        %s541 = scalar_lea.vmem %s6, %s540
      $region52: #{model_forward.1} parent=39 // pred_fallthru
        _
      // Predicated region
      $region53: #{model_forward.1} parent=39 // pred_check
        %p542 = pneg %p206
      $region54: #{model_forward.1} parent=39 // pred_check_branch
        %544 = sbr.rel (%p542) target = $region56
      $region55: #{model_forward.1} parent=39 // pred_region
        %p545 = scmp.lt.s32.totalorder %s24, 1
        %s546 = scalar_select %p545, %s24, 1
        %s547 = scalar_lea.vmem %s7, %s546
      $region56: #{model_forward.1} parent=39 // pred_fallthru
        _
      // Predicated region
      $region57: #{model_forward.1} parent=39 // pred_check
        %p548 = pneg %p232
      $region58: #{model_forward.1} parent=39 // pred_check_branch
        %550 = sbr.rel (%p548) target = $region60
      $region59: #{model_forward.1} parent=39 // pred_region
        %p551 = scmp.lt.s32.totalorder %s24, 1
        %s552 = scalar_select %p551, %s24, 1
        %s553 = scalar_lea.vmem %s8, %s552
      $region60: #{model_forward.1} parent=39 // pred_fallthru
        _
      // Predicated region
      $region61: #{model_forward.1} parent=39 // pred_check
        %p554 = pneg %p258
      $region62: #{model_forward.1} parent=39 // pred_check_branch
        %556 = sbr.rel (%p554) target = $region64
      $region63: #{model_forward.1} parent=39 // pred_region
        %p557 = scmp.lt.s32.totalorder %s24, 1
        %s558 = scalar_select %p557, %s24, 1
        %s559 = scalar_lea.vmem %s9, %s558
      $region64: #{model_forward.1} parent=39 // pred_fallthru
        _
      // Predicated region
      $region65: #{model_forward.1} parent=39 // pred_check
        %p560 = pneg %p284
      $region66: #{model_forward.1} parent=39 // pred_check_branch
        %562 = sbr.rel (%p560) target = $region68
      $region67: #{model_forward.1} parent=39 // pred_region
        %p563 = scmp.lt.s32.totalorder %s24, 1
        %s564 = scalar_select %p563, %s24, 1
        %s565 = smul.addr %s564, 4
        %s566 = smul.addr %s565, 8
        %s567 = scalar_lea.vmem %s10, %s566
      $region68: #{model_forward.1} parent=39 // pred_fallthru
        _
      // Predicated region
      $region69: #{model_forward.1} parent=39 // pred_check
        %p568 = pneg %p310
      $region70: #{model_forward.1} parent=39 // pred_check_branch
        %570 = sbr.rel (%p568) target = $region72
      $region71: #{model_forward.1} parent=39 // pred_region
        %p571 = scmp.lt.s32.totalorder %s24, 1
        %s572 = scalar_select %p571, %s24, 1
        %s573 = scalar_lea.vmem %s11, %s572
      $region72: #{model_forward.1} parent=39 // pred_fallthru
        _
      // Predicated region
      $region73: #{model_forward.1} parent=39 // pred_check
        %p574 = pneg %p336
      $region74: #{model_forward.1} parent=39 // pred_check_branch
        %576 = sbr.rel (%p574) target = $region76
      $region75: #{model_forward.1} parent=39 // pred_region
        %p577 = scmp.lt.s32.totalorder %s24, 1
        %s578 = scalar_select %p577, %s24, 1
        %s579 = smul.addr %s578, 8
        %s580 = smul.addr %s579, 8
        %s581 = scalar_lea.vmem %s12, %s580
      $region76: #{model_forward.1} parent=39 // pred_fallthru
        _
      // Predicated region
      $region77: #{model_forward.1} parent=39 // pred_check
        %p582 = pneg %p362
      $region78: #{model_forward.1} parent=39 // pred_check_branch
        %584 = sbr.rel (%p582) target = $region80
      $region79: #{model_forward.1} parent=39 // pred_region
        %p585 = scmp.lt.s32.totalorder %s24, 1
        %s586 = scalar_select %p585, %s24, 1
        %s587 = scalar_lea.vmem %s13, %s586
      $region80: #{model_forward.1} parent=39 // pred_fallthru
        _
      // Predicated region
      $region81: #{model_forward.1} parent=39 // pred_check
        %p588 = pneg %p388
      $region82: #{model_forward.1} parent=39 // pred_check_branch
        %590 = sbr.rel (%p588) target = $region84
      $region83: #{model_forward.1} parent=39 // pred_region
        %p591 = scmp.lt.s32.totalorder %s24, 1
        %s592 = scalar_select %p591, %s24, 1
        %s593 = scalar_lea.vmem %s14, %s592
      $region84: #{model_forward.1} parent=39 // pred_fallthru
        _
      // Predicated region
      $region85: #{model_forward.1} parent=39 // pred_check
        %p594 = pneg %p414
      $region86: #{model_forward.1} parent=39 // pred_check_branch
        %596 = sbr.rel (%p594) target = $region88
      $region87: #{model_forward.1} parent=39 // pred_region
        %p597 = scmp.lt.s32.totalorder %s24, 1
        %s598 = scalar_select %p597, %s24, 1
        %s599 = scalar_lea.vmem %s15, %s598
      $region88: #{model_forward.1} parent=39 // pred_fallthru
        _
    $region40: #{model_forward.1} parent=5 // pred_fallthru
      _
    %p600 = scmp.le.s32.totalorder 1, %s24
    %p601 = scmp.lt.s32.totalorder %s24, 3
    %p602 = pnand %p600, %p601
    %p603 = pneg %p602
    // Predicated region
    $region89: #{model_forward.1} parent=5 // pred_check
      _
    $region90: #{model_forward.1} parent=5 // pred_check_branch
      %605 = sbr.rel (%p602) target = $region92
    $region91: #{model_forward.1} parent=5 // pred_region
      %s606 = ssub.s32 %s24, 1
      %p607 = pneg %p45
      %p608 = pneg %p42
      %p609 = pneg %p66
      %p610 = pneg %p63
      %p611 = pneg %p87
      %p612 = pneg %p84
      %p613 = pneg %p108
      %p614 = pneg %p105
      %p615 = scmp.lt.s32.totalorder %s29, 1
      %s616 = scalar_select %p615, %s29, 1
      %s617 = smul.addr %s616, 4
      %s618 = smul.addr %s617, 8
      %s619 = scalar_lea.vmem %s4, %s618
      %p620 = pneg %p134
      %p621 = pneg %p131
      %p622 = scmp.lt.s32.totalorder %s29, 1
      %s623 = scalar_select %p622, %s29, 1
      %s624 = scalar_lea.vmem %s5, %s623
      %p625 = pneg %p160
      %p626 = pneg %p157
      %p627 = scmp.lt.s32.totalorder %s29, 1
      %s628 = scalar_select %p627, %s29, 1
      %s629 = smul.addr %s628, 4
      %s630 = smul.addr %s629, 8
      %s631 = scalar_lea.vmem %s6, %s630
      %p632 = pneg %p186
      %p633 = pneg %p183
      %p634 = scmp.lt.s32.totalorder %s29, 1
      %s635 = scalar_select %p634, %s29, 1
      %s636 = scalar_lea.vmem %s7, %s635
      %p637 = pneg %p212
      %p638 = pneg %p209
      %p639 = scmp.lt.s32.totalorder %s29, 1
      %s640 = scalar_select %p639, %s29, 1
      %s641 = scalar_lea.vmem %s8, %s640
      %p642 = pneg %p238
      %p643 = pneg %p235
      %p644 = scmp.lt.s32.totalorder %s29, 1
      %s645 = scalar_select %p644, %s29, 1
      %s646 = scalar_lea.vmem %s9, %s645
      %p647 = pneg %p264
      %p648 = pneg %p261
      %p649 = scmp.lt.s32.totalorder %s29, 1
      %s650 = scalar_select %p649, %s29, 1
      %s651 = smul.addr %s650, 4
      %s652 = smul.addr %s651, 8
      %s653 = scalar_lea.vmem %s10, %s652
      %p654 = pneg %p290
      %p655 = pneg %p287
      %p656 = scmp.lt.s32.totalorder %s29, 1
      %s657 = scalar_select %p656, %s29, 1
      %s658 = scalar_lea.vmem %s11, %s657
      %p659 = pneg %p316
      %p660 = pneg %p313
      %p661 = scmp.lt.s32.totalorder %s29, 1
      %s662 = scalar_select %p661, %s29, 1
      %s663 = smul.addr %s662, 8
      %s664 = smul.addr %s663, 8
      %s665 = scalar_lea.vmem %s12, %s664
      %p666 = pneg %p342
      %p667 = pneg %p339
      %p668 = scmp.lt.s32.totalorder %s29, 1
      %s669 = scalar_select %p668, %s29, 1
      %s670 = scalar_lea.vmem %s13, %s669
      %p671 = pneg %p368
      %p672 = pneg %p365
      %p673 = scmp.lt.s32.totalorder %s29, 1
      %s674 = scalar_select %p673, %s29, 1
      %s675 = scalar_lea.vmem %s14, %s674
      %p676 = pneg %p394
      %p677 = pneg %p391
      %p678 = scmp.lt.s32.totalorder %s29, 1
      %s679 = scalar_select %p678, %s29, 1
      %s680 = scalar_lea.vmem %s15, %s679
      %p681 = pneg %p420
      %p682 = pneg %p417
      %p683 = pneg %p441
      %p684 = pneg %p438
      %p685 = pneg %p462
      %p686 = pneg %p459
      %p687 = pneg %p483
      %p688 = pneg %p480
      %p689 = scmp.lt.s32.totalorder %s29, 1
      %s690 = scalar_select %p689, %s29, 1
      %s691 = smul.addr %s690, 4
      %s692 = smul.addr %s691, 8
      %s693 = scalar_lea.vmem %s4, %s692
      %p694 = scmp.lt.s32.totalorder %s29, 1
      %s695 = scalar_select %p694, %s29, 1
      %s696 = scalar_lea.vmem %s5, %s695
      %p697 = scmp.lt.s32.totalorder %s29, 1
      %s698 = scalar_select %p697, %s29, 1
      %s699 = smul.addr %s698, 4
      %s700 = smul.addr %s699, 8
      %s701 = scalar_lea.vmem %s6, %s700
      %p702 = scmp.lt.s32.totalorder %s29, 1
      %s703 = scalar_select %p702, %s29, 1
      %s704 = scalar_lea.vmem %s7, %s703
      %p705 = scmp.lt.s32.totalorder %s29, 1
      %s706 = scalar_select %p705, %s29, 1
      %s707 = scalar_lea.vmem %s8, %s706
      %p708 = scmp.lt.s32.totalorder %s29, 1
      %s709 = scalar_select %p708, %s29, 1
      %s710 = scalar_lea.vmem %s9, %s709
      %p711 = scmp.lt.s32.totalorder %s29, 1
      %s712 = scalar_select %p711, %s29, 1
      %s713 = smul.addr %s712, 4
      %s714 = smul.addr %s713, 8
      %s715 = scalar_lea.vmem %s10, %s714
      %p716 = scmp.lt.s32.totalorder %s29, 1
      %s717 = scalar_select %p716, %s29, 1
      %s718 = scalar_lea.vmem %s11, %s717
      %p719 = scmp.lt.s32.totalorder %s29, 1
      %s720 = scalar_select %p719, %s29, 1
      %s721 = smul.addr %s720, 8
      %s722 = smul.addr %s721, 8
      %s723 = scalar_lea.vmem %s12, %s722
      %p724 = scmp.lt.s32.totalorder %s29, 1
      %s725 = scalar_select %p724, %s29, 1
      %s726 = scalar_lea.vmem %s13, %s725
      %p727 = scmp.lt.s32.totalorder %s29, 1
      %s728 = scalar_select %p727, %s29, 1
      %s729 = scalar_lea.vmem %s14, %s728
      %p730 = scmp.lt.s32.totalorder %s29, 1
      %s731 = scalar_select %p730, %s29, 1
      %s732 = scalar_lea.vmem %s15, %s731
      %p734 = scmp.eq.s32.totalorder %s29, 0
      // Predicated region
      $region93: #{model_forward.1} parent=91 // pred_check
        %p735 = pneg %p734
      $region94: #{model_forward.1} parent=91 // pred_check_branch
        %737 = sbr.rel (%p735) target = $region96
      $region95: #{model_forward.1} parent=91 // pred_region
        %v738 = vld [vmem:[%s0] sm:$0xff]
        %v739 = vld [vmem:[%s0 + $0x8] sm:$0xff]
        %v740 = vld [vmem:[%s2] sm:$0x1]
        %v741 = vld [vmem:[%s3] sm:$0x1]
        %vm742 = vcmask 261120
        %v743 = vsel %vm742, %v738, 0.0
        %744 = vadd.xlane.f32.xlu0 %v743
        %v745 = vpop.xlane.xlu0 %744
        %v746 = vsel %vm742, %v739, 0.0
        %747 = vadd.xlane.f32.xlu0 %v746
        %v748 = vpop.xlane.xlu0 %747
        %v749 = vrcp.pop 32.0
        %v750 = vmul.f32 %v745, %v749
        %v751 = vmul.f32 %v748, %v749
        %v752 = vsub.f32 %v738, %v750
        %v753 = vsub.f32 %v739, %v751
        %v754 = vmul.f32 %v752, %v752
        %v755 = vmul.f32 %v753, %v753
        %v756 = vsel %vm742, %v754, 0.0
        %757 = vadd.xlane.f32.xlu0 %v756
        %v758 = vpop.xlane.xlu0 %757
        %v759 = vsel %vm742, %v755, 0.0
        %760 = vadd.xlane.f32.xlu0 %v759
        %v761 = vpop.xlane.xlu0 %760
        %v762 = vmul.f32 %v758, %v749
        %v763 = vmul.f32 %v761, %v749
        %v764 = vadd.f32 %v762, 1e-12
        %v765 = vadd.f32 %v763, 1e-12
        %v766 = vrsqrt.pop %v764
        %v767 = vrsqrt.pop %v765
        %v768 = vmul.f32 %v752, %v766
        %v769 = vmul.f32 %v753, %v767
        %v771 = vlaneseq
        %v772 = vshrl.u32 %v771, 7
        %v773 = vsub.s32 0, %v772
        %v774 = vrot.slane %v740, %v773
        %v776 = vmul.f32 %v768, %v774
        %v777 = vmul.f32 %v769, %v774
        %v779 = vlaneseq
        %v780 = vshrl.u32 %v779, 7
        %v781 = vsub.s32 0, %v780
        %v782 = vrot.slane %v741, %v781
        %v784 = vadd.f32 %v776, %v782
        %v785 = vadd.f32 %v777, %v782
        %786 = vst.msk [vmem:[#allocation2] sm:$0xff] %vm742, %v784
        %787 = vst.msk [vmem:[#allocation2 + $0x8] sm:$0xff] %vm742, %v785
      $region96: #{model_forward.1} parent=91 // pred_fallthru
        _
      %v788 = vld [vmem:[#allocation2] sm:$0xff]
      %v789 = vld [vmem:[#allocation2 + $0x8] sm:$0xff]
      %v790 = vld [vmem:[%s1] sm:$0xff]
      %v791 = vld [vmem:[%s1 + $0x8] sm:$0xff]
      %v792 = vld [vmem:[%s693] sm:$0xff]
      %v793 = vld [vmem:[%s693 + $0x8] sm:$0xff]
      %v794 = vld [vmem:[%s693 + $0x10] sm:$0xff]
      %v795 = vld [vmem:[%s693 + $0x18] sm:$0xff]
      %v796 = vpack.c.bf16 %v789, %v788
      %v797 = vpack.c.bf16 %v793, %v792
      %v798 = vpack.c.bf16 %v795, %v794
      %v799 = vld [vmem:[%s696] sm:$0x1]
      %v801 = vlaneseq
      %v802 = vshrl.u32 %v801, 7
      %v803 = vsub.s32 0, %v802
      %v804 = vrot.slane %v799, %v803
      %vm806 = vcmask 261120
      %v808 = vsel %vm806, %v796, 0
      %810 = vmatprep.subr.bf16.mxu0 0
      %811 = vmatpush1.bf16.msra.mxu0 %v797
      %812 = vmatprep.subr.bf16.mxu0 0
      %813 = vmatpush1.bf16.msra.mxu0 %v798
      %814 = vmatprep.subr.bf16.mxu0 0
      %815 = vmatpush1.bf16.msra.mxu0 0
      %816 = vmatprep.subr.bf16.mxu0 0
      %817 = vmatpush1.bf16.msra.mxu0 0
      %818 = vmatprep.subr.bf16.mxu0 0
      %819 = vmatpush1.bf16.msra.mxu0 0
      %820 = vmatprep.subr.bf16.mxu0 0
      %821 = vmatpush1.bf16.msra.mxu0 0
      %822 = vmatprep.subr.bf16.mxu0 0
      %823 = vmatpush1.bf16.msra.mxu0 0
      %824 = vmatprep.subr.bf16.mxu0 0
      %825 = vmatpush1.bf16.msra.mxu0 0
      %826 = vmatprep.subr.bf16.mxu0 0
      %827 = vmatpush1.bf16.msra.mxu0 0
      %828 = vmatprep.subr.bf16.mxu0 0
      %829 = vmatpush1.bf16.msra.mxu0 0
      %830 = vmatprep.subr.bf16.mxu0 0
      %831 = vmatpush1.bf16.msra.mxu0 0
      %832 = vmatprep.subr.bf16.mxu0 0
      %833 = vmatpush1.bf16.msra.mxu0 0
      %834 = vmatprep.subr.bf16.mxu0 0
      %835 = vmatpush1.bf16.msra.mxu0 0
      %836 = vmatprep.subr.bf16.mxu0 0
      %837 = vmatpush1.bf16.msra.mxu0 0
      %838 = vmatprep.subr.bf16.mxu0 0
      %839 = vmatpush1.bf16.msra.mxu0 0
      %840 = vmatprep.subr.bf16.mxu0 0
      %841 = vmatpush1.bf16.msra.mxu0 0
      %842 = vmatprep.mubr.bf16.mxu0 0
      %843 = vmatmul.mubr.bf16.gmra.mrb[0].mxu0 %v808
      %v844 = vpop.f32.mrb[0].mxu0
      %v845 = vadd.f32 %v804, %v844
      %v846 = vpop.f32.mrb[0].mxu0
      %v847 = vpop.f32.mrb[0].mxu0
      %v848 = vadd.f32 %v804, %v847
      %v849 = vpop.f32.mrb[0].mxu0
      %850 = vdwg.mxu0
      %v851 = vpack.c.bf16 %v848, %v845
      %853 = vrot.lane.b32.xlu0 %v851, 96
      %v854 = vpop.permute.xlu0 %853
      %vm855 = vcmask 64512
      %v857 = vsel %vm855, %v851, 0
      %v860 = vsel %vm855, %v854, 0
      %862 = vmatprep.subr.bf16.mxu0 0
      %863 = vmatpush1.bf16.xpose.msra.mxu0 %v860
      %864 = vmatprep.subr.bf16.mxu0 0
      %865 = vmatpush1.bf16.xpose.msra.mxu0 0
      %866 = vmatprep.subr.bf16.mxu0 0
      %867 = vmatpush1.bf16.xpose.msra.mxu0 0
      %868 = vmatprep.subr.bf16.mxu0 0
      %869 = vmatpush1.bf16.xpose.msra.mxu0 0
      %870 = vmatprep.subr.bf16.mxu0 0
      %871 = vmatpush1.bf16.xpose.msra.mxu0 0
      %872 = vmatprep.subr.bf16.mxu0 0
      %873 = vmatpush1.bf16.xpose.msra.mxu0 0
      %874 = vmatprep.subr.bf16.mxu0 0
      %875 = vmatpush1.bf16.xpose.msra.mxu0 0
      %876 = vmatprep.subr.bf16.mxu0 0
      %877 = vmatpush1.bf16.xpose.msra.mxu0 0
      %878 = vmatprep.subr.bf16.mxu0 0
      %879 = vmatpush1.bf16.xpose.msra.mxu0 0
      %880 = vmatprep.subr.bf16.mxu0 0
      %881 = vmatpush1.bf16.xpose.msra.mxu0 0
      %882 = vmatprep.subr.bf16.mxu0 0
      %883 = vmatpush1.bf16.xpose.msra.mxu0 0
      %884 = vmatprep.subr.bf16.mxu0 0
      %885 = vmatpush1.bf16.xpose.msra.mxu0 0
      %886 = vmatprep.subr.bf16.mxu0 0
      %887 = vmatpush1.bf16.xpose.msra.mxu0 0
      %888 = vmatprep.subr.bf16.mxu0 0
      %889 = vmatpush1.bf16.xpose.msra.mxu0 0
      %890 = vmatprep.subr.bf16.mxu0 0
      %891 = vmatpush1.bf16.xpose.msra.mxu0 0
      %892 = vmatprep.subr.bf16.mxu0 0
      %893 = vmatpush1.bf16.xpose.msra.mxu0 0
      %894 = vmatprep.mubr.bf16.mxu0 0
      %895 = vmatmul.mubr.bf16.gmra.mrb[0].mxu0 %v857
      %v896 = vpop.f32.mrb[0].mxu0
      %v897 = vadd.f32 0.0, %v896
      %v898 = vpop.f32.mrb[0].mxu0
      %v899 = vpop.f32.mrb[0].mxu0
      %v900 = vadd.f32 0.0, %v899
      %v901 = vpop.f32.mrb[0].mxu0
      %902 = vdwg.mxu0
      %v903 = vmul.f32 %v897, 0.35355338
      %v904 = vmul.f32 %v900, 0.35355338
      %v905 = vadd.f32 %v903, %v790
      %v906 = vadd.f32 %v904, %v791
      %vm907 = vcmask 130048
      %v908 = vsel %vm907, %v905, -inf
      %909 = vmax.xlane.f32.xlu0 %v908
      %v910 = vpop.xlane.xlu0 %909
      %v911 = vsel %vm907, %v906, -inf
      %912 = vmax.xlane.f32.xlu0 %v911
      %v913 = vpop.xlane.xlu0 %912
      %v914 = vsub.f32 %v905, %v910
      %v915 = vsub.f32 %v906, %v913
      %v916 = vmul.f32 %v914, 1.442695
      %v917 = vpow.pop %v916
      %v918 = vmul.f32 %v915, 1.442695
      %v919 = vpow.pop %v918
      %v920 = vsel %vm907, %v917, 0.0
      %921 = vadd.xlane.f32.xlu0 %v920
      %v922 = vpop.xlane.xlu0 %921
      %v923 = vsel %vm907, %v919, 0.0
      %924 = vadd.xlane.f32.xlu0 %v923
      %v925 = vpop.xlane.xlu0 %924
      %v926 = vrcp.pop %v922
      %v927 = vrcp.pop %v925
      %v928 = vmul.f32 %v917, %v926
      %v929 = vmul.f32 %v919, %v927
      %v930 = vpack.c.bf16 %v929, %v928
      %931 = vrot.lane.b32.xlu0 %v851, 64
      %v932 = vpop.permute.xlu0 %931
      %v935 = vsel %vm907, %v930, 0
      %937 = vmatprep.subr.bf16.mxu0 0
      %938 = vmatpush1.bf16.msra.mxu0 %v932
      %939 = vmatprep.subr.bf16.mxu0 0
      %940 = vmatpush1.bf16.msra.mxu0 0
      %941 = vmatprep.subr.bf16.mxu0 0
      %942 = vmatpush1.bf16.msra.mxu0 0
      %943 = vmatprep.subr.bf16.mxu0 0
      %944 = vmatpush1.bf16.msra.mxu0 0
      %945 = vmatprep.subr.bf16.mxu0 0
      %946 = vmatpush1.bf16.msra.mxu0 0
      %947 = vmatprep.subr.bf16.mxu0 0
      %948 = vmatpush1.bf16.msra.mxu0 0
      %949 = vmatprep.subr.bf16.mxu0 0
      %950 = vmatpush1.bf16.msra.mxu0 0
      %951 = vmatprep.subr.bf16.mxu0 0
      %952 = vmatpush1.bf16.msra.mxu0 0
      %953 = vmatprep.subr.bf16.mxu0 0
      %954 = vmatpush1.bf16.msra.mxu0 0
      %955 = vmatprep.subr.bf16.mxu0 0
      %956 = vmatpush1.bf16.msra.mxu0 0
      %957 = vmatprep.subr.bf16.mxu0 0
      %958 = vmatpush1.bf16.msra.mxu0 0
      %959 = vmatprep.subr.bf16.mxu0 0
      %960 = vmatpush1.bf16.msra.mxu0 0
      %961 = vmatprep.subr.bf16.mxu0 0
      %962 = vmatpush1.bf16.msra.mxu0 0
      %963 = vmatprep.subr.bf16.mxu0 0
      %964 = vmatpush1.bf16.msra.mxu0 0
      %965 = vmatprep.subr.bf16.mxu0 0
      %966 = vmatpush1.bf16.msra.mxu0 0
      %967 = vmatprep.subr.bf16.mxu0 0
      %968 = vmatpush1.bf16.msra.mxu0 0
      %969 = vmatprep.mubr.bf16.mxu0 0
      %970 = vmatmul.mubr.bf16.gmra.mrb[0].mxu0 %v935
      %v971 = vpop.f32.mrb[0].mxu0
      %v972 = vadd.f32 0.0, %v971
      %v973 = vpop.f32.mrb[0].mxu0
      %v974 = vpop.f32.mrb[0].mxu0
      %v975 = vadd.f32 0.0, %v974
      %v976 = vpop.f32.mrb[0].mxu0
      %977 = vdwg.mxu0
      %978 = vrot.lane.b32.xlu0 %v851, 120
      %v979 = vpop.permute.xlu0 %978
      %980 = vrot.lane.b32.xlu0 %v851, 88
      %v981 = vpop.permute.xlu0 %980
      %v983 = vsel %vm855, %v979, 0
      %v986 = vsel %vm855, %v981, 0
      %988 = vmatprep.subr.bf16.mxu0 0
      %989 = vmatpush1.bf16.xpose.msra.mxu0 %v986
      %990 = vmatprep.subr.bf16.mxu0 0
      %991 = vmatpush1.bf16.xpose.msra.mxu0 0
      %992 = vmatprep.subr.bf16.mxu0 0
      %993 = vmatpush1.bf16.xpose.msra.mxu0 0
      %994 = vmatprep.subr.bf16.mxu0 0
      %995 = vmatpush1.bf16.xpose.msra.mxu0 0
      %996 = vmatprep.subr.bf16.mxu0 0
      %997 = vmatpush1.bf16.xpose.msra.mxu0 0
      %998 = vmatprep.subr.bf16.mxu0 0
      %999 = vmatpush1.bf16.xpose.msra.mxu0 0
      %1000 = vmatprep.subr.bf16.mxu0 0
      %1001 = vmatpush1.bf16.xpose.msra.mxu0 0
      %1002 = vmatprep.subr.bf16.mxu0 0
      %1003 = vmatpush1.bf16.xpose.msra.mxu0 0
      %1004 = vmatprep.subr.bf16.mxu0 0
      %1005 = vmatpush1.bf16.xpose.msra.mxu0 0
      %1006 = vmatprep.subr.bf16.mxu0 0
      %1007 = vmatpush1.bf16.xpose.msra.mxu0 0
      %1008 = vmatprep.subr.bf16.mxu0 0
      %1009 = vmatpush1.bf16.xpose.msra.mxu0 0
      %1010 = vmatprep.subr.bf16.mxu0 0
      %1011 = vmatpush1.bf16.xpose.msra.mxu0 0
      %1012 = vmatprep.subr.bf16.mxu0 0
      %1013 = vmatpush1.bf16.xpose.msra.mxu0 0
      %1014 = vmatprep.subr.bf16.mxu0 0
      %1015 = vmatpush1.bf16.xpose.msra.mxu0 0
      %1016 = vmatprep.subr.bf16.mxu0 0
      %1017 = vmatpush1.bf16.xpose.msra.mxu0 0
      %1018 = vmatprep.subr.bf16.mxu0 0
      %1019 = vmatpush1.bf16.xpose.msra.mxu0 0
      %1020 = vmatprep.mubr.bf16.mxu0 0
      %1021 = vmatmul.mubr.bf16.gmra.mrb[0].mxu0 %v983
      %v1022 = vpop.f32.mrb[0].mxu0
      %v1023 = vadd.f32 0.0, %v1022
      %v1024 = vpop.f32.mrb[0].mxu0
      %v1025 = vpop.f32.mrb[0].mxu0
      %v1026 = vadd.f32 0.0, %v1025
      %v1027 = vpop.f32.mrb[0].mxu0
      %1028 = vdwg.mxu0
      %v1029 = vmul.f32 %v1023, 0.35355338
      %v1030 = vmul.f32 %v1026, 0.35355338
      %v1031 = vadd.f32 %v1029, %v790
      %v1032 = vadd.f32 %v1030, %v791
      %v1033 = vsel %vm907, %v1031, -inf
      %1034 = vmax.xlane.f32.xlu0 %v1033
      %v1035 = vpop.xlane.xlu0 %1034
      %v1036 = vsel %vm907, %v1032, -inf
      %1037 = vmax.xlane.f32.xlu0 %v1036
      %v1038 = vpop.xlane.xlu0 %1037
      %v1039 = vsub.f32 %v1031, %v1035
      %v1040 = vsub.f32 %v1032, %v1038
      %v1041 = vmul.f32 %v1039, 1.442695
      %v1042 = vpow.pop %v1041
      %v1043 = vmul.f32 %v1040, 1.442695
      %v1044 = vpow.pop %v1043
      %v1045 = vsel %vm907, %v1042, 0.0
      %1046 = vadd.xlane.f32.xlu0 %v1045
      %v1047 = vpop.xlane.xlu0 %1046
      %v1048 = vsel %vm907, %v1044, 0.0
      %1049 = vadd.xlane.f32.xlu0 %v1048
      %v1050 = vpop.xlane.xlu0 %1049
      %v1051 = vrcp.pop %v1047
      %v1052 = vrcp.pop %v1050
      %v1053 = vmul.f32 %v1042, %v1051
      %v1054 = vmul.f32 %v1044, %v1052
      %v1055 = vpack.c.bf16 %v1054, %v1053
      %1056 = vrot.lane.b32.xlu0 %v851, 56
      %v1057 = vpop.permute.xlu0 %1056
      %v1060 = vsel %vm907, %v1055, 0
      %1062 = vmatprep.subr.bf16.mxu0 0
      %1063 = vmatpush1.bf16.msra.mxu0 %v1057
      %1064 = vmatprep.subr.bf16.mxu0 0
      %1065 = vmatpush1.bf16.msra.mxu0 0
      %1066 = vmatprep.subr.bf16.mxu0 0
      %1067 = vmatpush1.bf16.msra.mxu0 0
      %1068 = vmatprep.subr.bf16.mxu0 0
      %1069 = vmatpush1.bf16.msra.mxu0 0
      %1070 = vmatprep.subr.bf16.mxu0 0
      %1071 = vmatpush1.bf16.msra.mxu0 0
      %1072 = vmatprep.subr.bf16.mxu0 0
      %1073 = vmatpush1.bf16.msra.mxu0 0
      %1074 = vmatprep.subr.bf16.mxu0 0
      %1075 = vmatpush1.bf16.msra.mxu0 0
      %1076 = vmatprep.subr.bf16.mxu0 0
      %1077 = vmatpush1.bf16.msra.mxu0 0
      %1078 = vmatprep.subr.bf16.mxu0 0
      %1079 = vmatpush1.bf16.msra.mxu0 0
      %1080 = vmatprep.subr.bf16.mxu0 0
      %1081 = vmatpush1.bf16.msra.mxu0 0
      %1082 = vmatprep.subr.bf16.mxu0 0
      %1083 = vmatpush1.bf16.msra.mxu0 0
      %1084 = vmatprep.subr.bf16.mxu0 0
      %1085 = vmatpush1.bf16.msra.mxu0 0
      %1086 = vmatprep.subr.bf16.mxu0 0
      %1087 = vmatpush1.bf16.msra.mxu0 0
      %1088 = vmatprep.subr.bf16.mxu0 0
      %1089 = vmatpush1.bf16.msra.mxu0 0
      %1090 = vmatprep.subr.bf16.mxu0 0
      %1091 = vmatpush1.bf16.msra.mxu0 0
      %1092 = vmatprep.subr.bf16.mxu0 0
      %1093 = vmatpush1.bf16.msra.mxu0 0
      %1094 = vmatprep.mubr.bf16.mxu0 0
      %1095 = vmatmul.mubr.bf16.gmra.mrb[0].mxu0 %v1060
      %v1096 = vpop.f32.mrb[0].mxu0
      %v1097 = vadd.f32 0.0, %v1096
      %v1098 = vpop.f32.mrb[0].mxu0
      %v1099 = vpop.f32.mrb[0].mxu0
      %v1100 = vadd.f32 0.0, %v1099
      %v1101 = vpop.f32.mrb[0].mxu0
      %1102 = vdwg.mxu0
      %1103 = vrot.lane.b32.xlu0 %v851, 112
      %v1104 = vpop.permute.xlu0 %1103
      %1105 = vrot.lane.b32.xlu0 %v851, 80
      %v1106 = vpop.permute.xlu0 %1105
      %v1108 = vsel %vm855, %v1104, 0
      %v1111 = vsel %vm855, %v1106, 0
      %1113 = vmatprep.subr.bf16.mxu0 0
      %1114 = vmatpush1.bf16.xpose.msra.mxu0 %v1111
      %1115 = vmatprep.subr.bf16.mxu0 0
      %1116 = vmatpush1.bf16.xpose.msra.mxu0 0
      %1117 = vmatprep.subr.bf16.mxu0 0
      %1118 = vmatpush1.bf16.xpose.msra.mxu0 0
      %1119 = vmatprep.subr.bf16.mxu0 0
      %1120 = vmatpush1.bf16.xpose.msra.mxu0 0
      %1121 = vmatprep.subr.bf16.mxu0 0
      %1122 = vmatpush1.bf16.xpose.msra.mxu0 0
      %1123 = vmatprep.subr.bf16.mxu0 0
      %1124 = vmatpush1.bf16.xpose.msra.mxu0 0
      %1125 = vmatprep.subr.bf16.mxu0 0
      %1126 = vmatpush1.bf16.xpose.msra.mxu0 0
      %1127 = vmatprep.subr.bf16.mxu0 0
      %1128 = vmatpush1.bf16.xpose.msra.mxu0 0
      %1129 = vmatprep.subr.bf16.mxu0 0
      %1130 = vmatpush1.bf16.xpose.msra.mxu0 0
      %1131 = vmatprep.subr.bf16.mxu0 0
      %1132 = vmatpush1.bf16.xpose.msra.mxu0 0
      %1133 = vmatprep.subr.bf16.mxu0 0
      %1134 = vmatpush1.bf16.xpose.msra.mxu0 0
      %1135 = vmatprep.subr.bf16.mxu0 0
      %1136 = vmatpush1.bf16.xpose.msra.mxu0 0
      %1137 = vmatprep.subr.bf16.mxu0 0
      %1138 = vmatpush1.bf16.xpose.msra.mxu0 0
      %1139 = vmatprep.subr.bf16.mxu0 0
      %1140 = vmatpush1.bf16.xpose.msra.mxu0 0
      %1141 = vmatprep.subr.bf16.mxu0 0
      %1142 = vmatpush1.bf16.xpose.msra.mxu0 0
      %1143 = vmatprep.subr.bf16.mxu0 0
      %1144 = vmatpush1.bf16.xpose.msra.mxu0 0
      %1145 = vmatprep.mubr.bf16.mxu0 0
      %1146 = vmatmul.mubr.bf16.gmra.mrb[0].mxu0 %v1108
      %v1147 = vpop.f32.mrb[0].mxu0
      %v1148 = vadd.f32 0.0, %v1147
      %v1149 = vpop.f32.mrb[0].mxu0
      %v1150 = vpop.f32.mrb[0].mxu0
      %v1151 = vadd.f32 0.0, %v1150
      %v1152 = vpop.f32.mrb[0].mxu0
      %1153 = vdwg.mxu0
      %v1154 = vmul.f32 %v1148, 0.35355338
      %v1155 = vmul.f32 %v1151, 0.35355338
      %v1156 = vadd.f32 %v1154, %v790
      %v1157 = vadd.f32 %v1155, %v791
      %v1158 = vsel %vm907, %v1156, -inf
      %1159 = vmax.xlane.f32.xlu0 %v1158
      %v1160 = vpop.xlane.xlu0 %1159
      %v1161 = vsel %vm907, %v1157, -inf
      %1162 = vmax.xlane.f32.xlu0 %v1161
      %v1163 = vpop.xlane.xlu0 %1162
      %v1164 = vsub.f32 %v1156, %v1160
      %v1165 = vsub.f32 %v1157, %v1163
      %v1166 = vmul.f32 %v1164, 1.442695
      %v1167 = vpow.pop %v1166
      %v1168 = vmul.f32 %v1165, 1.442695
      %v1169 = vpow.pop %v1168
      %v1170 = vsel %vm907, %v1167, 0.0
      %1171 = vadd.xlane.f32.xlu0 %v1170
      %v1172 = vpop.xlane.xlu0 %1171
      %v1173 = vsel %vm907, %v1169, 0.0
      %1174 = vadd.xlane.f32.xlu0 %v1173
      %v1175 = vpop.xlane.xlu0 %1174
      %v1176 = vrcp.pop %v1172
      %v1177 = vrcp.pop %v1175
      %v1178 = vmul.f32 %v1167, %v1176
      %v1179 = vmul.f32 %v1169, %v1177
      %v1180 = vpack.c.bf16 %v1179, %v1178
      %1181 = vrot.lane.b32.xlu0 %v851, 48
      %v1182 = vpop.permute.xlu0 %1181
      %v1185 = vsel %vm907, %v1180, 0
      %1187 = vmatprep.subr.bf16.mxu0 0
      %1188 = vmatpush1.bf16.msra.mxu0 %v1182
      %1189 = vmatprep.subr.bf16.mxu0 0
      %1190 = vmatpush1.bf16.msra.mxu0 0
      %1191 = vmatprep.subr.bf16.mxu0 0
      %1192 = vmatpush1.bf16.msra.mxu0 0
      %1193 = vmatprep.subr.bf16.mxu0 0
      %1194 = vmatpush1.bf16.msra.mxu0 0
      %1195 = vmatprep.subr.bf16.mxu0 0
      %1196 = vmatpush1.bf16.msra.mxu0 0
      %1197 = vmatprep.subr.bf16.mxu0 0
      %1198 = vmatpush1.bf16.msra.mxu0 0
      %1199 = vmatprep.subr.bf16.mxu0 0
      %1200 = vmatpush1.bf16.msra.mxu0 0
      %1201 = vmatprep.subr.bf16.mxu0 0
      %1202 = vmatpush1.bf16.msra.mxu0 0
      %1203 = vmatprep.subr.bf16.mxu0 0
      %1204 = vmatpush1.bf16.msra.mxu0 0
      %1205 = vmatprep.subr.bf16.mxu0 0
      %1206 = vmatpush1.bf16.msra.mxu0 0
      %1207 = vmatprep.subr.bf16.mxu0 0
      %1208 = vmatpush1.bf16.msra.mxu0 0
      %1209 = vmatprep.subr.bf16.mxu0 0
      %1210 = vmatpush1.bf16.msra.mxu0 0
      %1211 = vmatprep.subr.bf16.mxu0 0
      %1212 = vmatpush1.bf16.msra.mxu0 0
      %1213 = vmatprep.subr.bf16.mxu0 0
      %1214 = vmatpush1.bf16.msra.mxu0 0
      %1215 = vmatprep.subr.bf16.mxu0 0
      %1216 = vmatpush1.bf16.msra.mxu0 0
      %1217 = vmatprep.subr.bf16.mxu0 0
      %1218 = vmatpush1.bf16.msra.mxu0 0
      %1219 = vmatprep.mubr.bf16.mxu0 0
      %1220 = vmatmul.mubr.bf16.gmra.mrb[0].mxu0 %v1185
      %v1221 = vpop.f32.mrb[0].mxu0
      %v1222 = vadd.f32 0.0, %v1221
      %v1223 = vpop.f32.mrb[0].mxu0
      %v1224 = vpop.f32.mrb[0].mxu0
      %v1225 = vadd.f32 0.0, %v1224
      %v1226 = vpop.f32.mrb[0].mxu0
      %1227 = vdwg.mxu0
      %1228 = vrot.lane.b32.xlu0 %v851, 104
      %v1229 = vpop.permute.xlu0 %1228
      %1230 = vrot.lane.b32.xlu0 %v851, 72
      %v1231 = vpop.permute.xlu0 %1230
      %v1233 = vsel %vm855, %v1229, 0
      %v1236 = vsel %vm855, %v1231, 0
      %1238 = vmatprep.subr.bf16.mxu0 0
      %1239 = vmatpush1.bf16.xpose.msra.mxu0 %v1236
      %1240 = vmatprep.subr.bf16.mxu0 0
      %1241 = vmatpush1.bf16.xpose.msra.mxu0 0
      %1242 = vmatprep.subr.bf16.mxu0 0
      %1243 = vmatpush1.bf16.xpose.msra.mxu0 0
      %1244 = vmatprep.subr.bf16.mxu0 0
      %1245 = vmatpush1.bf16.xpose.msra.mxu0 0
      %1246 = vmatprep.subr.bf16.mxu0 0
      %1247 = vmatpush1.bf16.xpose.msra.mxu0 0
      %1248 = vmatprep.subr.bf16.mxu0 0
      %1249 = vmatpush1.bf16.xpose.msra.mxu0 0
      %1250 = vmatprep.subr.bf16.mxu0 0
      %1251 = vmatpush1.bf16.xpose.msra.mxu0 0
      %1252 = vmatprep.subr.bf16.mxu0 0
      %1253 = vmatpush1.bf16.xpose.msra.mxu0 0
      %1254 = vmatprep.subr.bf16.mxu0 0
      %1255 = vmatpush1.bf16.xpose.msra.mxu0 0
      %1256 = vmatprep.subr.bf16.mxu0 0
      %1257 = vmatpush1.bf16.xpose.msra.mxu0 0
      %1258 = vmatprep.subr.bf16.mxu0 0
      %1259 = vmatpush1.bf16.xpose.msra.mxu0 0
      %1260 = vmatprep.subr.bf16.mxu0 0
      %1261 = vmatpush1.bf16.xpose.msra.mxu0 0
      %1262 = vmatprep.subr.bf16.mxu0 0
      %1263 = vmatpush1.bf16.xpose.msra.mxu0 0
      %1264 = vmatprep.subr.bf16.mxu0 0
      %1265 = vmatpush1.bf16.xpose.msra.mxu0 0
      %1266 = vmatprep.subr.bf16.mxu0 0
      %1267 = vmatpush1.bf16.xpose.msra.mxu0 0
      %1268 = vmatprep.subr.bf16.mxu0 0
      %1269 = vmatpush1.bf16.xpose.msra.mxu0 0
      %1270 = vmatprep.mubr.bf16.mxu0 0
      %1271 = vmatmul.mubr.bf16.gmra.mrb[0].mxu0 %v1233
      %v1272 = vpop.f32.mrb[0].mxu0
      %v1273 = vadd.f32 0.0, %v1272
      %v1274 = vpop.f32.mrb[0].mxu0
      %v1275 = vpop.f32.mrb[0].mxu0
      %v1276 = vadd.f32 0.0, %v1275
      %v1277 = vpop.f32.mrb[0].mxu0
      %1278 = vdwg.mxu0
      %v1279 = vmul.f32 %v1273, 0.35355338
      %v1280 = vmul.f32 %v1276, 0.35355338
      %v1281 = vadd.f32 %v1279, %v790
      %v1282 = vadd.f32 %v1280, %v791
      %v1283 = vsel %vm907, %v1281, -inf
      %1284 = vmax.xlane.f32.xlu0 %v1283
      %v1285 = vpop.xlane.xlu0 %1284
      %v1286 = vsel %vm907, %v1282, -inf
      %1287 = vmax.xlane.f32.xlu0 %v1286
      %v1288 = vpop.xlane.xlu0 %1287
      %v1289 = vsub.f32 %v1281, %v1285
      %v1290 = vsub.f32 %v1282, %v1288
      %v1291 = vmul.f32 %v1289, 1.442695
      %v1292 = vpow.pop %v1291
      %v1293 = vmul.f32 %v1290, 1.442695
      %v1294 = vpow.pop %v1293
      %v1295 = vsel %vm907, %v1292, 0.0
      %1296 = vadd.xlane.f32.xlu0 %v1295
      %v1297 = vpop.xlane.xlu0 %1296
      %v1298 = vsel %vm907, %v1294, 0.0
      %1299 = vadd.xlane.f32.xlu0 %v1298
      %v1300 = vpop.xlane.xlu0 %1299
      %v1301 = vrcp.pop %v1297
      %v1302 = vrcp.pop %v1300
      %v1303 = vmul.f32 %v1292, %v1301
      %v1304 = vmul.f32 %v1294, %v1302
      %v1305 = vpack.c.bf16 %v1304, %v1303
      %1306 = vrot.lane.b32.xlu0 %v851, 40
      %v1307 = vpop.permute.xlu0 %1306
      %v1310 = vsel %vm907, %v1305, 0
      %1312 = vmatprep.subr.bf16.mxu0 0
      %1313 = vmatpush1.bf16.msra.mxu0 %v1307
      %1314 = vmatprep.subr.bf16.mxu0 0
      %1315 = vmatpush1.bf16.msra.mxu0 0
      %1316 = vmatprep.subr.bf16.mxu0 0
      %1317 = vmatpush1.bf16.msra.mxu0 0
      %1318 = vmatprep.subr.bf16.mxu0 0
      %1319 = vmatpush1.bf16.msra.mxu0 0
      %1320 = vmatprep.subr.bf16.mxu0 0
      %1321 = vmatpush1.bf16.msra.mxu0 0
      %1322 = vmatprep.subr.bf16.mxu0 0
      %1323 = vmatpush1.bf16.msra.mxu0 0
      %1324 = vmatprep.subr.bf16.mxu0 0
      %1325 = vmatpush1.bf16.msra.mxu0 0
      %1326 = vmatprep.subr.bf16.mxu0 0
      %1327 = vmatpush1.bf16.msra.mxu0 0
      %1328 = vmatprep.subr.bf16.mxu0 0
      %1329 = vmatpush1.bf16.msra.mxu0 0
      %1330 = vmatprep.subr.bf16.mxu0 0
      %1331 = vmatpush1.bf16.msra.mxu0 0
      %1332 = vmatprep.subr.bf16.mxu0 0
      %1333 = vmatpush1.bf16.msra.mxu0 0
      %1334 = vmatprep.subr.bf16.mxu0 0
      %1335 = vmatpush1.bf16.msra.mxu0 0
      %1336 = vmatprep.subr.bf16.mxu0 0
      %1337 = vmatpush1.bf16.msra.mxu0 0
      %1338 = vmatprep.subr.bf16.mxu0 0
      %1339 = vmatpush1.bf16.msra.mxu0 0
      %1340 = vmatprep.subr.bf16.mxu0 0
      %1341 = vmatpush1.bf16.msra.mxu0 0
      %1342 = vmatprep.subr.bf16.mxu0 0
      %1343 = vmatpush1.bf16.msra.mxu0 0
      %1344 = vmatprep.mubr.bf16.mxu0 0
      %1345 = vmatmul.mubr.bf16.gmra.mrb[0].mxu0 %v1310
      %v1346 = vpop.f32.mrb[0].mxu0
      %v1347 = vadd.f32 0.0, %v1346
      %v1348 = vpop.f32.mrb[0].mxu0
      %v1349 = vpop.f32.mrb[0].mxu0
      %v1350 = vadd.f32 0.0, %v1349
      %v1351 = vpop.f32.mrb[0].mxu0
      %1352 = vdwg.mxu0
      %1355 = vrot.lane.b32.xlu0 %v1097, 8
      %v1356 = vpop.permute.xlu0 %1355
      %1357 = vrot.lane.b32.xlu0 %v1100, 8
      %v1358 = vpop.permute.xlu0 %1357
      %1363 = vrot.lane.b32.xlu0 %v1222, 16
      %v1364 = vpop.permute.xlu0 %1363
      %1365 = vrot.lane.b32.xlu0 %v1225, 16
      %v1366 = vpop.permute.xlu0 %1365
      %1371 = vrot.lane.b32.xlu0 %v1347, 24
      %v1372 = vpop.permute.xlu0 %1371
      %1373 = vrot.lane.b32.xlu0 %v1350, 24
      %v1374 = vpop.permute.xlu0 %1373
      %v1377 = vsel %vm855, %v972, %v1356
      %v1378 = vsel %vm855, %v975, %v1358
      %v1379 = vsel %vm907, %v1377, %v1364
      %v1380 = vsel %vm907, %v1378, %v1366
      %vm1381 = vcmask 195584
      %v1382 = vsel %vm1381, %v1379, %v1372
      %v1383 = vsel %vm1381, %v1380, %v1374
      %v1384 = vld [vmem:[%s701] sm:$0xff]
      %v1385 = vld [vmem:[%s701 + $0x8] sm:$0xff]
      %v1386 = vld [vmem:[%s701 + $0x10] sm:$0xff]
      %v1387 = vld [vmem:[%s701 + $0x18] sm:$0xff]
      %v1388 = vpack.c.bf16 %v1383, %v1382
      %v1389 = vpack.c.bf16 %v1385, %v1384
      %v1390 = vpack.c.bf16 %v1387, %v1386
      %v1391 = vld [vmem:[%s704] sm:$0x1]
      %v1393 = vlaneseq
      %v1394 = vshrl.u32 %v1393, 7
      %v1395 = vsub.s32 0, %v1394
      %v1396 = vrot.slane %v1391, %v1395
      %v1399 = vsel %vm806, %v1388, 0
      %1401 = vmatprep.subr.bf16.mxu0 0
      %1402 = vmatpush1.bf16.msra.mxu0 %v1389
      %1403 = vmatprep.subr.bf16.mxu0 0
      %1404 = vmatpush1.bf16.msra.mxu0 %v1390
      %1405 = vmatprep.subr.bf16.mxu0 0
      %1406 = vmatpush1.bf16.msra.mxu0 0
      %1407 = vmatprep.subr.bf16.mxu0 0
      %1408 = vmatpush1.bf16.msra.mxu0 0
      %1409 = vmatprep.subr.bf16.mxu0 0
      %1410 = vmatpush1.bf16.msra.mxu0 0
      %1411 = vmatprep.subr.bf16.mxu0 0
      %1412 = vmatpush1.bf16.msra.mxu0 0
      %1413 = vmatprep.subr.bf16.mxu0 0
      %1414 = vmatpush1.bf16.msra.mxu0 0
      %1415 = vmatprep.subr.bf16.mxu0 0
      %1416 = vmatpush1.bf16.msra.mxu0 0
      %1417 = vmatprep.subr.bf16.mxu0 0
      %1418 = vmatpush1.bf16.msra.mxu0 0
      %1419 = vmatprep.subr.bf16.mxu0 0
      %1420 = vmatpush1.bf16.msra.mxu0 0
      %1421 = vmatprep.subr.bf16.mxu0 0
      %1422 = vmatpush1.bf16.msra.mxu0 0
      %1423 = vmatprep.subr.bf16.mxu0 0
      %1424 = vmatpush1.bf16.msra.mxu0 0
      %1425 = vmatprep.subr.bf16.mxu0 0
      %1426 = vmatpush1.bf16.msra.mxu0 0
      %1427 = vmatprep.subr.bf16.mxu0 0
      %1428 = vmatpush1.bf16.msra.mxu0 0
      %1429 = vmatprep.subr.bf16.mxu0 0
      %1430 = vmatpush1.bf16.msra.mxu0 0
      %1431 = vmatprep.subr.bf16.mxu0 0
      %1432 = vmatpush1.bf16.msra.mxu0 0
      %1433 = vmatprep.mubr.bf16.mxu0 0
      %1434 = vmatmul.mubr.bf16.gmra.mrb[0].mxu0 %v1399
      %v1435 = vpop.f32.mrb[0].mxu0
      %v1436 = vadd.f32 %v1396, %v1435
      %v1437 = vpop.f32.mrb[0].mxu0
      %v1438 = vpop.f32.mrb[0].mxu0
      %v1439 = vadd.f32 %v1396, %v1438
      %v1440 = vpop.f32.mrb[0].mxu0
      %1441 = vdwg.mxu0
      %v1442 = vadd.f32 %v1436, %v788
      %v1443 = vadd.f32 %v1439, %v789
      %v1444 = vld [vmem:[%s707] sm:$0x1]
      %v1445 = vld [vmem:[%s710] sm:$0x1]
      %v1446 = vsel %vm806, %v1442, 0.0
      %1447 = vadd.xlane.f32.xlu0 %v1446
      %v1448 = vpop.xlane.xlu0 %1447
      %v1449 = vsel %vm806, %v1443, 0.0
      %1450 = vadd.xlane.f32.xlu0 %v1449
      %v1451 = vpop.xlane.xlu0 %1450
      %v1452 = vrcp.pop 32.0
      %v1453 = vmul.f32 %v1448, %v1452
      %v1454 = vmul.f32 %v1451, %v1452
      %v1455 = vsub.f32 %v1442, %v1453
      %v1456 = vsub.f32 %v1443, %v1454
      %v1457 = vmul.f32 %v1455, %v1455
      %v1458 = vmul.f32 %v1456, %v1456
      %v1459 = vsel %vm806, %v1457, 0.0
      %1460 = vadd.xlane.f32.xlu0 %v1459
      %v1461 = vpop.xlane.xlu0 %1460
      %v1462 = vsel %vm806, %v1458, 0.0
      %1463 = vadd.xlane.f32.xlu0 %v1462
      %v1464 = vpop.xlane.xlu0 %1463
      %v1465 = vmul.f32 %v1461, %v1452
      %v1466 = vmul.f32 %v1464, %v1452
      %v1467 = vadd.f32 %v1465, 1e-12
      %v1468 = vadd.f32 %v1466, 1e-12
      %v1469 = vrsqrt.pop %v1467
      %v1470 = vrsqrt.pop %v1468
      %v1471 = vmul.f32 %v1455, %v1469
      %v1472 = vmul.f32 %v1456, %v1470
      %v1474 = vlaneseq
      %v1475 = vshrl.u32 %v1474, 7
      %v1476 = vsub.s32 0, %v1475
      %v1477 = vrot.slane %v1444, %v1476
      %v1479 = vmul.f32 %v1471, %v1477
      %v1480 = vmul.f32 %v1472, %v1477
      %v1482 = vlaneseq
      %v1483 = vshrl.u32 %v1482, 7
      %v1484 = vsub.s32 0, %v1483
      %v1485 = vrot.slane %v1445, %v1484
      %v1487 = vadd.f32 %v1479, %v1485
      %v1488 = vadd.f32 %v1480, %v1485
      %v1489 = vld [vmem:[%s715] sm:$0xff]
      %v1490 = vld [vmem:[%s715 + $0x8] sm:$0xff]
      %v1491 = vld [vmem:[%s715 + $0x10] sm:$0xff]
      %v1492 = vld [vmem:[%s715 + $0x18] sm:$0xff]
      %v1493 = vpack.c.bf16 %v1488, %v1487
      %v1494 = vpack.c.bf16 %v1490, %v1489
      %v1495 = vpack.c.bf16 %v1492, %v1491
      %v1496 = vld [vmem:[%s718] sm:$0x1]
      %v1498 = vlaneseq
      %v1499 = vshrl.u32 %v1498, 7
      %v1500 = vsub.s32 0, %v1499
      %v1501 = vrot.slane %v1496, %v1500
      %v1504 = vsel %vm806, %v1493, 0
      %1506 = vmatprep.subr.bf16.mxu0 0
      %1507 = vmatpush1.bf16.msra.mxu0 %v1494
      %1508 = vmatprep.subr.bf16.mxu0 0
      %1509 = vmatpush1.bf16.msra.mxu0 %v1495
      %1510 = vmatprep.subr.bf16.mxu0 0
      %1511 = vmatpush1.bf16.msra.mxu0 0
      %1512 = vmatprep.subr.bf16.mxu0 0
      %1513 = vmatpush1.bf16.msra.mxu0 0
      %1514 = vmatprep.subr.bf16.mxu0 0
      %1515 = vmatpush1.bf16.msra.mxu0 0
      %1516 = vmatprep.subr.bf16.mxu0 0
      %1517 = vmatpush1.bf16.msra.mxu0 0
      %1518 = vmatprep.subr.bf16.mxu0 0
      %1519 = vmatpush1.bf16.msra.mxu0 0
      %1520 = vmatprep.subr.bf16.mxu0 0
      %1521 = vmatpush1.bf16.msra.mxu0 0
      %1522 = vmatprep.subr.bf16.mxu0 0
      %1523 = vmatpush1.bf16.msra.mxu0 0
      %1524 = vmatprep.subr.bf16.mxu0 0
      %1525 = vmatpush1.bf16.msra.mxu0 0
      %1526 = vmatprep.subr.bf16.mxu0 0
      %1527 = vmatpush1.bf16.msra.mxu0 0
      %1528 = vmatprep.subr.bf16.mxu0 0
      %1529 = vmatpush1.bf16.msra.mxu0 0
      %1530 = vmatprep.subr.bf16.mxu0 0
      %1531 = vmatpush1.bf16.msra.mxu0 0
      %1532 = vmatprep.subr.bf16.mxu0 0
      %1533 = vmatpush1.bf16.msra.mxu0 0
      %1534 = vmatprep.subr.bf16.mxu0 0
      %1535 = vmatpush1.bf16.msra.mxu0 0
      %1536 = vmatprep.subr.bf16.mxu0 0
      %1537 = vmatpush1.bf16.msra.mxu0 0
      %1538 = vmatprep.mubr.bf16.mxu0 0
      %1539 = vmatmul.mubr.bf16.gmra.mrb[0].mxu0 %v1504
      %v1540 = vpop.f32.mrb[0].mxu0
      %v1541 = vadd.f32 %v1501, %v1540
      %v1542 = vpop.f32.mrb[0].mxu0
      %v1543 = vpop.f32.mrb[0].mxu0
      %v1544 = vadd.f32 %v1501, %v1543
      %v1545 = vpop.f32.mrb[0].mxu0
      %1546 = vdwg.mxu0
      %v1547 = vmul.f32 %v1541, 0.5
      %v1548 = vmul.f32 %v1544, 0.5
      %v1549 = vmul.f32 %v1541, 0.044715
      %v1550 = vmul.f32 %v1544, 0.044715
      %v1551 = vmul.f32 %v1549, %v1541
      %v1552 = vmul.f32 %v1550, %v1544
      %v1553 = vmul.f32 %v1551, %v1541
      %v1554 = vmul.f32 %v1552, %v1544
      %v1555 = vadd.f32 %v1541, %v1553
      %v1556 = vadd.f32 %v1544, %v1554
      %v1557 = vmul.f32 %v1555, 0.7978846
      %v1558 = vmul.f32 %v1556, 0.7978846
      %v1559 = vtanh.pop %v1557
      %v1560 = vtanh.pop %v1558
      %v1561 = vadd.f32 %v1559, 1.0
      %v1562 = vadd.f32 %v1560, 1.0
      %v1563 = vmul.f32 %v1547, %v1561
      %v1564 = vmul.f32 %v1548, %v1562
      %v1565 = vld [vmem:[%s723] sm:$0xff]
      %v1566 = vld [vmem:[%s723 + $0x8] sm:$0xff]
      %v1567 = vld [vmem:[%s723 + $0x10] sm:$0xff]
      %v1568 = vld [vmem:[%s723 + $0x18] sm:$0xff]
      %v1569 = vld [vmem:[%s723 + $0x20] sm:$0xff]
      %v1570 = vld [vmem:[%s723 + $0x28] sm:$0xff]
      %v1571 = vld [vmem:[%s723 + $0x30] sm:$0xff]
      %v1572 = vld [vmem:[%s723 + $0x38] sm:$0xff]
      %v1573 = vpack.c.bf16 %v1564, %v1563
      %v1574 = vpack.c.bf16 %v1566, %v1565
      %v1575 = vpack.c.bf16 %v1568, %v1567
      %v1576 = vpack.c.bf16 %v1570, %v1569
      %v1577 = vpack.c.bf16 %v1572, %v1571
      %v1578 = vld [vmem:[%s726] sm:$0x1]
      %v1580 = vlaneseq
      %v1581 = vshrl.u32 %v1580, 7
      %v1582 = vsub.s32 0, %v1581
      %v1583 = vrot.slane %v1578, %v1582
      %vm1585 = vcmask 523264
      %v1587 = vsel %vm1585, %v1573, 0
      %1589 = vmatprep.subr.bf16.mxu0 0
      %1590 = vmatpush1.bf16.msra.mxu0 %v1574
      %1591 = vmatprep.subr.bf16.mxu0 0
      %1592 = vmatpush1.bf16.msra.mxu0 %v1575
      %1593 = vmatprep.subr.bf16.mxu0 0
      %1594 = vmatpush1.bf16.msra.mxu0 %v1576
      %1595 = vmatprep.subr.bf16.mxu0 0
      %1596 = vmatpush1.bf16.msra.mxu0 %v1577
      %1597 = vmatprep.subr.bf16.mxu0 0
      %1598 = vmatpush1.bf16.msra.mxu0 0
      %1599 = vmatprep.subr.bf16.mxu0 0
      %1600 = vmatpush1.bf16.msra.mxu0 0
      %1601 = vmatprep.subr.bf16.mxu0 0
      %1602 = vmatpush1.bf16.msra.mxu0 0
      %1603 = vmatprep.subr.bf16.mxu0 0
      %1604 = vmatpush1.bf16.msra.mxu0 0
      %1605 = vmatprep.subr.bf16.mxu0 0
      %1606 = vmatpush1.bf16.msra.mxu0 0
      %1607 = vmatprep.subr.bf16.mxu0 0
      %1608 = vmatpush1.bf16.msra.mxu0 0
      %1609 = vmatprep.subr.bf16.mxu0 0
      %1610 = vmatpush1.bf16.msra.mxu0 0
      %1611 = vmatprep.subr.bf16.mxu0 0
      %1612 = vmatpush1.bf16.msra.mxu0 0
      %1613 = vmatprep.subr.bf16.mxu0 0
      %1614 = vmatpush1.bf16.msra.mxu0 0
      %1615 = vmatprep.subr.bf16.mxu0 0
      %1616 = vmatpush1.bf16.msra.mxu0 0
      %1617 = vmatprep.subr.bf16.mxu0 0
      %1618 = vmatpush1.bf16.msra.mxu0 0
      %1619 = vmatprep.subr.bf16.mxu0 0
      %1620 = vmatpush1.bf16.msra.mxu0 0
      %1621 = vmatprep.mubr.bf16.mxu0 0
      %1622 = vmatmul.mubr.bf16.gmra.mrb[0].mxu0 %v1587
      %v1623 = vpop.f32.mrb[0].mxu0
      %v1624 = vadd.f32 %v1583, %v1623
      %v1625 = vpop.f32.mrb[0].mxu0
      %v1626 = vpop.f32.mrb[0].mxu0
      %v1627 = vadd.f32 %v1583, %v1626
      %v1628 = vpop.f32.mrb[0].mxu0
      %1629 = vdwg.mxu0
      %v1630 = vadd.f32 %v1624, %v1487
      %v1631 = vadd.f32 %v1627, %v1488
      %v1632 = vld [vmem:[%s729] sm:$0x1]
      %v1633 = vld [vmem:[%s732] sm:$0x1]
      %v1634 = vsel %vm806, %v1630, 0.0
      %1635 = vadd.xlane.f32.xlu0 %v1634
      %v1636 = vpop.xlane.xlu0 %1635
      %v1637 = vsel %vm806, %v1631, 0.0
      %1638 = vadd.xlane.f32.xlu0 %v1637
      %v1639 = vpop.xlane.xlu0 %1638
      %v1640 = vmul.f32 %v1636, %v1452
      %v1641 = vmul.f32 %v1639, %v1452
      %v1642 = vsub.f32 %v1630, %v1640
      %v1643 = vsub.f32 %v1631, %v1641
      %v1644 = vmul.f32 %v1642, %v1642
      %v1645 = vmul.f32 %v1643, %v1643
      %v1646 = vsel %vm806, %v1644, 0.0
      %1647 = vadd.xlane.f32.xlu0 %v1646
      %v1648 = vpop.xlane.xlu0 %1647
      %v1649 = vsel %vm806, %v1645, 0.0
      %1650 = vadd.xlane.f32.xlu0 %v1649
      %v1651 = vpop.xlane.xlu0 %1650
      %v1652 = vmul.f32 %v1648, %v1452
      %v1653 = vmul.f32 %v1651, %v1452
      %v1654 = vadd.f32 %v1652, 1e-12
      %v1655 = vadd.f32 %v1653, 1e-12
      %v1656 = vrsqrt.pop %v1654
      %v1657 = vrsqrt.pop %v1655
      %v1658 = vmul.f32 %v1642, %v1656
      %v1659 = vmul.f32 %v1643, %v1657
      %v1661 = vlaneseq
      %v1662 = vshrl.u32 %v1661, 7
      %v1663 = vsub.s32 0, %v1662
      %v1664 = vrot.slane %v1632, %v1663
      %v1666 = vmul.f32 %v1658, %v1664
      %v1667 = vmul.f32 %v1659, %v1664
      %v1669 = vlaneseq
      %v1670 = vshrl.u32 %v1669, 7
      %v1671 = vsub.s32 0, %v1670
      %v1672 = vrot.slane %v1633, %v1671
      %v1674 = vadd.f32 %v1666, %v1672
      %v1675 = vadd.f32 %v1667, %v1672
      %1676 = vst.msk [vmem:[#allocation2] sm:$0xff] %vm806, %v1674
      %1677 = vst.msk [vmem:[#allocation2 + $0x8] sm:$0xff] %vm806, %v1675
      %p1678 = scmp.eq.s32.totalorder %s29, 1
      // Predicated region
      $region97: #{model_forward.1} parent=91 // pred_check
        %p1679 = pneg %p1678
      $region98: #{model_forward.1} parent=91 // pred_check_branch
        %1681 = sbr.rel (%p1679) target = $region100
      $region99: #{model_forward.1} parent=91 // pred_region
        %v1682 = vld [vmem:[%s16] sm:$0xff]
        %v1683 = vld [vmem:[%s16 + $0x8] sm:$0xff]
        %v1684 = vld [vmem:[%s16 + $0x10] sm:$0xff]
        %v1685 = vld [vmem:[%s16 + $0x18] sm:$0xff]
        %v1686 = vpack.c.bf16 %v1675, %v1674
        %v1687 = vpack.c.bf16 %v1683, %v1682
        %v1688 = vpack.c.bf16 %v1685, %v1684
        %v1689 = vld [vmem:[%s17] sm:$0x1]
        %v1691 = vlaneseq
        %v1692 = vshrl.u32 %v1691, 7
        %v1693 = vsub.s32 0, %v1692
        %v1694 = vrot.slane %v1689, %v1693
        %v1697 = vsel %vm806, %v1686, 0
        %1699 = vmatprep.subr.bf16.mxu0 0
        %1700 = vmatpush1.bf16.msra.mxu0 %v1687
        %1701 = vmatprep.subr.bf16.mxu0 0
        %1702 = vmatpush1.bf16.msra.mxu0 %v1688
        %1703 = vmatprep.subr.bf16.mxu0 0
        %1704 = vmatpush1.bf16.msra.mxu0 0
        %1705 = vmatprep.subr.bf16.mxu0 0
        %1706 = vmatpush1.bf16.msra.mxu0 0
        %1707 = vmatprep.subr.bf16.mxu0 0
        %1708 = vmatpush1.bf16.msra.mxu0 0
        %1709 = vmatprep.subr.bf16.mxu0 0
        %1710 = vmatpush1.bf16.msra.mxu0 0
        %1711 = vmatprep.subr.bf16.mxu0 0
        %1712 = vmatpush1.bf16.msra.mxu0 0
        %1713 = vmatprep.subr.bf16.mxu0 0
        %1714 = vmatpush1.bf16.msra.mxu0 0
        %1715 = vmatprep.subr.bf16.mxu0 0
        %1716 = vmatpush1.bf16.msra.mxu0 0
        %1717 = vmatprep.subr.bf16.mxu0 0
        %1718 = vmatpush1.bf16.msra.mxu0 0
        %1719 = vmatprep.subr.bf16.mxu0 0
        %1720 = vmatpush1.bf16.msra.mxu0 0
        %1721 = vmatprep.subr.bf16.mxu0 0
        %1722 = vmatpush1.bf16.msra.mxu0 0
        %1723 = vmatprep.subr.bf16.mxu0 0
        %1724 = vmatpush1.bf16.msra.mxu0 0
        %1725 = vmatprep.subr.bf16.mxu0 0
        %1726 = vmatpush1.bf16.msra.mxu0 0
        %1727 = vmatprep.subr.bf16.mxu0 0
        %1728 = vmatpush1.bf16.msra.mxu0 0
        %1729 = vmatprep.subr.bf16.mxu0 0
        %1730 = vmatpush1.bf16.msra.mxu0 0
        %1731 = vmatprep.mubr.bf16.mxu0 0
        %1732 = vmatmul.mubr.bf16.gmra.mrb[0].mxu0 %v1697
        %v1733 = vpop.f32.mrb[0].mxu0
        %v1734 = vadd.f32 %v1694, %v1733
        %v1735 = vpop.f32.mrb[0].mxu0
        %v1736 = vpop.f32.mrb[0].mxu0
        %v1737 = vadd.f32 %v1694, %v1736
        %v1738 = vpop.f32.mrb[0].mxu0
        %1739 = vdwg.mxu0
        %1740 = vst [vmem:[%s18] sm:$0xff] %v1734
        %1741 = vst [vmem:[%s18 + $0x8] sm:$0xff] %v1737
      $region100: #{model_forward.1} parent=91 // pred_fallthru
        _
      // Predicated region
      $region101: #{model_forward.1} parent=91 // pred_check
        %p1742 = pneg %p480
      $region102: #{model_forward.1} parent=91 // pred_check_branch
        %1744 = sbr.rel (%p1742) target = $region104
      $region103: #{model_forward.1} parent=91 // pred_region
        _
      $region104: #{model_forward.1} parent=91 // pred_fallthru
        _
      // Predicated region
      $region105: #{model_forward.1} parent=91 // pred_check
        %p1745 = pneg %p480
      $region106: #{model_forward.1} parent=91 // pred_check_branch
        %1747 = sbr.rel (%p1745) target = $region108
      $region107: #{model_forward.1} parent=91 // pred_region
        _
      $region108: #{model_forward.1} parent=91 // pred_fallthru
        _
    $region92: #{model_forward.1} parent=5 // pred_fallthru
      _
    %p1748 = scmp.le.s32.totalorder 2, %s24
    // Predicated region
    $region109: #{model_forward.1} parent=5 // pred_check
      %p1749 = pneg %p1748
    $region110: #{model_forward.1} parent=5 // pred_check_branch
      %1751 = sbr.rel (%p1749) target = $region112
    $region111: #{model_forward.1} parent=5 // pred_region
      %s1752 = ssub.s32 %s24, 2
    $region112: #{model_forward.1} parent=5 // pred_fallthru
      _
  $region6: #{model_forward.1} parent=0 // loop_footer
    %s28 = sadd.s32 1, %s24
  $region7: #{model_forward.1} parent=0 // loop_footer_branch
    %23 = sbr.rel target = $region3
  $region8: #{model_forward.1} parent=0 // loop_exit
    _

</llo_original>
